<compile_context>
chip_gen: v5e
topology: v5e:2x2
jax: 0.10.0
libtpu: 0.0.40
codegen_flags: <defaults>
</compile_context>

<pallas_src>
import math

import jax
import jax.numpy as jnp
from jax import lax
from jax.experimental import pallas as pl
from jax.experimental.pallas import tpu as pltpu

# ------------------------- miniature configuration -------------------------
B = 2              # batch
S = 8              # sequence length (power of two; see SEQ_SHIFT)
D = 32             # hidden size (stands in for 768)
H = 2              # backbone encoder attention heads
DH = D // H
FF = 4 * D         # backbone FFN hidden (4x, like RoBERTa) -> 128, lane dense
C = 10             # num_classes
C_PAD = 128        # lane-padded classifier width (sliced back to C outside)
HEAD_H = 1         # kernel_attention_num_heads for the classifier EncoderBlock
VOCAB = 100
VOCAB_PAD = 128    # vocab padded so the one-hot lookup matmul is lane-dense
NEG_INF = -1e9
LN_EPS = 1e-5
T = B * S          # flattened token count

SEQ_SHIFT = int(math.log2(S))
assert (1 << SEQ_SHIFT) == S, "S must be a power of two for the shift-based mask"


# ------------------------------ kernel helpers ------------------------------
def _layer_norm(y, g, b):
    mu = jnp.mean(y, axis=-1, keepdims=True)
    var = jnp.mean((y - mu) ** 2, axis=-1, keepdims=True)
    return (y - mu) * lax.rsqrt(var + LN_EPS) * g + b


def _mha(h, wqkv, bqkv, wo, bo, nheads, bias):
    """Multi-head self-attention with fused QKV and head-shared softmax.

    * One (n,D)x(D,3D) projection; q/k/v are static lane slices.
    * 1/sqrt(dh) is pre-folded into the q columns of wqkv/bqkv at init.
    * Scores use dot_general contracting the last dims (no k transpose).
    * Per-head scores are stacked along sublanes so max/exp/sum/divide run once.
    * Each head's context is accumulated directly through its slice of wo
      (no concatenate of contexts).
    """
    n = h.shape[0]
    dh = D // nheads
    qkv = jnp.dot(h, wqkv, preferred_element_type=jnp.float32) + bqkv
    q = qkv[:, :D]
    k = qkv[:, D:2 * D]
    v = qkv[:, 2 * D:3 * D]

    s_list = []
    for hd in range(nheads):                       # static loop over heads
        sl = slice(hd * dh, (hd + 1) * dh)
        s = lax.dot_general(q[:, sl], k[:, sl],
                            dimension_numbers=(((1,), (1,)), ((), ())),
                            preferred_element_type=jnp.float32)
        s_list.append(s + bias)
    s_all = s_list[0] if nheads == 1 else jnp.concatenate(s_list, axis=0)

    # shared softmax across heads (exact divide for parity with the reference)
    s_all = s_all - jnp.max(s_all, axis=-1, keepdims=True)
    e = jnp.exp(s_all)
    p_all = e / jnp.sum(e, axis=-1, keepdims=True)

    out = jnp.zeros((n, D), jnp.float32)
    for hd in range(nheads):
        sl = slice(hd * dh, (hd + 1) * dh)
        p = p_all[hd * n:(hd + 1) * n, :]
        ctx = jnp.dot(p, v[:, sl], preferred_element_type=jnp.float32)
        out = out + jnp.dot(ctx, wo[sl, :], preferred_element_type=jnp.float32)
    return out + bo


# ------------------------------ fused kernel --------------------------------
def fused_forward_kernel(
    ids_ref, mask_ref,
    wemb_ref, pos_ref, emb_g_ref, emb_b_ref,
    wqkv_ref, bqkv_ref, wo_ref, bo_ref, ln1_g_ref, ln1_b_ref,
    w1_ref, b1_ref, w2_ref, b2_ref, ln2_g_ref, ln2_b_ref,
    hwqkv_ref, hbqkv_ref, hwo_ref, hbo_ref, hln_g_ref, hln_b_ref,
    cls_w_ref,
    o_ref,
):
    # --- in-kernel embedding lookup: one-hot (T,128) x (128,D) MXU matmul ---
    ids = ids_ref[...]                                              # (T, 1) i32
    vocab_iota = lax.broadcasted_iota(jnp.int32, (T, VOCAB_PAD), 1)
    one_hot = (vocab_iota == ids).astype(jnp.float32)               # (T, 128)
    emb = jnp.dot(one_hot, wemb_ref[...], preferred_element_type=jnp.float32)
    h0 = _layer_norm(emb + pos_ref[...], emb_g_ref[...], emb_b_ref[...])

    # Block-diagonal (per-sequence) mask: batch rows are folded into the
    # sublane axis and must not attend across sequences.  The frozen backbone
    # additionally applies the padding attention_mask; the classifier-head
    # EncoderBlock does NOT (it only receives hidden states in the original).
    row_seq = jnp.right_shift(
        lax.broadcasted_iota(jnp.int32, (T, T), 0), SEQ_SHIFT)
    col_seq = jnp.right_shift(
        lax.broadcasted_iota(jnp.int32, (T, T), 1), SEQ_SHIFT)
    same_seq = row_seq == col_seq
    pad_ok = mask_ref[...] > 0.5                                    # (1, T)
    enc_bias = jnp.where(jnp.logical_and(same_seq, pad_ok), 0.0, NEG_INF)
    head_bias = jnp.where(same_seq, 0.0, NEG_INF)

    # --- frozen backbone encoder layer: MHA + res + LN, FFN(gelu) + res + LN ---
    attn = _mha(h0, wqkv_ref[...], bqkv_ref[...], wo_ref[...], bo_ref[...],
                H, enc_bias)
    h1 = _layer_norm(h0 + attn, ln1_g_ref[...], ln1_b_ref[...])
    ff = jnp.dot(h1, w1_ref[...], preferred_element_type=jnp.float32) + b1_ref[...]
    # TODO(synk): HF RoBERTa uses exact erf GELU; tanh approximation kept here
    # for lowering safety in the stand-in backbone.
    ff = jax.nn.gelu(ff)
    ff = jnp.dot(ff, w2_ref[...], preferred_element_type=jnp.float32) + b2_ref[...]
    h2 = _layer_norm(h1 + ff, ln2_g_ref[...], ln2_b_ref[...])

    # --- classifier head EncoderBlock: attention=True, ff=False, residual=True ---
    # TODO(synk): exact EncoderBlock source not included in the spec; assumed
    # post-LN structure y = LayerNorm(x + SelfAttn(x)) with ff branch disabled.
    hattn = _mha(h2, hwqkv_ref[...], hbqkv_ref[...], hwo_ref[...], hbo_ref[...],
                 HEAD_H, head_bias)
    h3 = _layer_norm(h2 + hattn, hln_g_ref[...], hln_b_ref[...])

    # --- final Linear(D, C); lane-padded to C_PAD for a dense, unmasked store.
    # Classifier bias is zero at init, so it is dropped entirely.
    o_ref[...] = jnp.dot(h3, cls_w_ref[...], preferred_element_type=jnp.float32)


# ----------------------------- pallas_call glue -----------------------------
def _spec(shape):
    """Whole-array VMEM-resident block (single grid step)."""
    return pl.BlockSpec(shape, lambda i: (0,) * len(shape))


def run_fused(ids_2d, mask_2d, p):
    in_specs = [
        _spec((T, 1)),                                    # input_ids
        _spec((1, T)),                                    # padding mask
        _spec((VOCAB_PAD, D)), _spec((T, D)),             # word emb, tiled pos emb
        _spec((1, D)), _spec((1, D)),                     # emb LN
        _spec((D, 3 * D)), _spec((1, 3 * D)),             # fused wqkv, bqkv
        _spec((D, D)), _spec((1, D)),                     # wo, bo
        _spec((1, D)), _spec((1, D)),                     # ln1
        _spec((D, FF)), _spec((1, FF)),                   # w1, b1
        _spec((FF, D)), _spec((1, D)),                    # w2, b2
        _spec((1, D)), _spec((1, D)),                     # ln2
        _spec((D, 3 * D)), _spec((1, 3 * D)),             # head fused wqkv, bqkv
        _spec((D, D)), _spec((1, D)),                     # head wo, bo
        _spec((1, D)), _spec((1, D)),                     # head ln
        _spec((D, C_PAD)),                                # classifier weight (padded)
    ]

    return pl.pallas_call(
        fused_forward_kernel,
        out_shape=jax.ShapeDtypeStruct((T, C_PAD), jnp.float32),
        grid=(1,),
        in_specs=in_specs,
        out_specs=pl.BlockSpec((T, C_PAD), lambda i: (0, 0)),
        compiler_params=pltpu.CompilerParams(
            dimension_semantics=("arbitrary",),
            vmem_limit_bytes=32 * 1024 * 1024),
    )(
        ids_2d, mask_2d,
        p["wemb"], p["pos_t"], p["emb_g"], p["emb_b"],
        p["wqkv"], p["bqkv"], p["wo"], p["bo"], p["ln1_g"], p["ln1_b"],
        p["w1"], p["b1"], p["w2"], p["b2"], p["ln2_g"], p["ln2_b"],
        p["hwqkv"], p["hbqkv"], p["hwo"], p["hbo"], p["hln_g"], p["hln_b"],
        p["cls_w"],
    )


# -------------------------------- forward ----------------------------------
def forward(input_ids, attention_mask, p):
    ids_2d = input_ids.reshape(T, 1).astype(jnp.int32)
    mask_2d = attention_mask.astype(jnp.float32).reshape(1, T)
    logits_pad = run_fused(ids_2d, mask_2d, p)          # (T, C_PAD)
    return logits_pad[:, :C].reshape(B, S, C)


# ---------------------------- deterministic init ----------------------------
def init_params(key):
    ks = jax.random.split(key, 16)

    def w(k, shape, scale=0.02):
        return (scale * jax.random.normal(k, shape)).astype(jnp.float32)

    zD = jnp.zeros((1, D), jnp.float32)
    oD = jnp.ones((1, D), jnp.float32)

    # embeddings; vocab rows padded to 128 for the in-kernel one-hot matmul
    wemb = jnp.zeros((VOCAB_PAD, D), jnp.float32).at[:VOCAB].set(w(ks[0], (VOCAB, D)))
    pos_t = jnp.tile(w(ks[1], (S, D)), (B, 1))           # (T, D), per-sequence tile

    # frozen backbone attention: fused QKV with 1/sqrt(dh) folded into q columns
    enc_scale = 1.0 / math.sqrt(DH)
    wq, wk, wv = w(ks[2], (D, D)), w(ks[3], (D, D)), w(ks[4], (D, D))
    wqkv = jnp.concatenate([wq * enc_scale, wk, wv], axis=1)
    bqkv = jnp.zeros((1, 3 * D), jnp.float32)            # (bq*scale | bk | bv), zero here

    # classifier-head EncoderBlock attention (single head -> dh = D)
    head_scale = 1.0 / math.sqrt(D // HEAD_H)
    hwq, hwk, hwv = w(ks[8], (D, D)), w(ks[9], (D, D)), w(ks[10], (D, D))
    hwqkv = jnp.concatenate([hwq * head_scale, hwk, hwv], axis=1)
    hbqkv = jnp.zeros((1, 3 * D), jnp.float32)

    # final Linear(D, C), lane-padded to C_PAD; bias is zero and dropped in-kernel
    cls_w = jnp.zeros((D, C_PAD), jnp.float32).at[:, :C].set(w(ks[12], (D, C)))

    return {
        "wemb": wemb, "pos_t": pos_t, "emb_g": oD, "emb_b": zD,
        "wqkv": wqkv, "bqkv": bqkv,
        "wo": w(ks[5], (D, D)), "bo": zD,
        "ln1_g": oD, "ln1_b": zD,
        "w1": w(ks[6], (D, FF)), "b1": jnp.zeros((1, FF), jnp.float32),
        "w2": w(ks[7], (FF, D)), "b2": zD,
        "ln2_g": oD, "ln2_b": zD,
        "hwqkv": hwqkv, "hbqkv": hbqkv,
        "hwo": w(ks[11], (D, D)), "hbo": zD,
        "hln_g": oD, "hln_b": zD,
        "cls_w": cls_w,
    }


if __name__ == "__main__":
    key = jax.random.PRNGKey(0)
    k_ids, k_params = jax.random.split(key)

    input_ids = jax.random.randint(k_ids, (B, S), 0, VOCAB, dtype=jnp.int32)
    attention_mask = jnp.ones((B, S), jnp.int32).at[1, S - 1].set(0)  # pad 1 token
    params = init_params(k_params)

    fwd = jax.jit(forward)
    logits = jax.block_until_ready(fwd(input_ids, attention_mask, params))

    assert logits.shape == (B, S, C), logits.shape
    assert bool(jnp.all(jnp.isfinite(logits)))
    print("KERNEL_OK")
</pallas_src>

<mosaic_0001>
module attributes {stable_mosaic.version = 11 : i64} {
  func.func @fused_forward_kernel(%arg0: i32, %arg1: memref<16x1xi32, #tpu.memory_space<vmem>>, %arg2: memref<1x16xf32, #tpu.memory_space<vmem>>, %arg3: memref<128x32xf32, #tpu.memory_space<vmem>>, %arg4: memref<16x32xf32, #tpu.memory_space<vmem>>, %arg5: memref<1x32xf32, #tpu.memory_space<vmem>>, %arg6: memref<1x32xf32, #tpu.memory_space<vmem>>, %arg7: memref<32x96xf32, #tpu.memory_space<vmem>>, %arg8: memref<1x96xf32, #tpu.memory_space<vmem>>, %arg9: memref<32x32xf32, #tpu.memory_space<vmem>>, %arg10: memref<1x32xf32, #tpu.memory_space<vmem>>, %arg11: memref<1x32xf32, #tpu.memory_space<vmem>>, %arg12: memref<1x32xf32, #tpu.memory_space<vmem>>, %arg13: memref<32x128xf32, #tpu.memory_space<vmem>>, %arg14: memref<1x128xf32, #tpu.memory_space<vmem>>, %arg15: memref<128x32xf32, #tpu.memory_space<vmem>>, %arg16: memref<1x32xf32, #tpu.memory_space<vmem>>, %arg17: memref<1x32xf32, #tpu.memory_space<vmem>>, %arg18: memref<1x32xf32, #tpu.memory_space<vmem>>, %arg19: memref<32x96xf32, #tpu.memory_space<vmem>>, %arg20: memref<1x96xf32, #tpu.memory_space<vmem>>, %arg21: memref<32x32xf32, #tpu.memory_space<vmem>>, %arg22: memref<1x32xf32, #tpu.memory_space<vmem>>, %arg23: memref<1x32xf32, #tpu.memory_space<vmem>>, %arg24: memref<1x32xf32, #tpu.memory_space<vmem>>, %arg25: memref<32x128xf32, #tpu.memory_space<vmem>>, %arg26: memref<16x128xf32, #tpu.memory_space<vmem>>) attributes {dimension_semantics = [#tpu.dimension_semantics<arbitrary>], iteration_bounds = array<i64: 1>, scalar_prefetch = 0 : i64, scratch_operands = 0 : i64, tpu.core_type = #tpu.core_type<tc>, window_params = [{pipeline_mode = #tpu.pipeline_mode<synchronous>, transform_indices = @transform_0, window_bounds = array<i64: 16, 1>}, {pipeline_mode = #tpu.pipeline_mode<synchronous>, transform_indices = @transform_1, window_bounds = array<i64: 1, 16>}, {pipeline_mode = #tpu.pipeline_mode<synchronous>, transform_indices = @transform_2, window_bounds = array<i64: 128, 32>}, {pipeline_mode = #tpu.pipeline_mode<synchronous>, transform_indices = @transform_3, window_bounds = array<i64: 16, 32>}, {pipeline_mode = #tpu.pipeline_mode<synchronous>, transform_indices = @transform_4, window_bounds = array<i64: 1, 32>}, {pipeline_mode = #tpu.pipeline_mode<synchronous>, transform_indices = @transform_5, window_bounds = array<i64: 1, 32>}, {pipeline_mode = #tpu.pipeline_mode<synchronous>, transform_indices = @transform_6, window_bounds = array<i64: 32, 96>}, {pipeline_mode = #tpu.pipeline_mode<synchronous>, transform_indices = @transform_7, window_bounds = array<i64: 1, 96>}, {pipeline_mode = #tpu.pipeline_mode<synchronous>, transform_indices = @transform_8, window_bounds = array<i64: 32, 32>}, {pipeline_mode = #tpu.pipeline_mode<synchronous>, transform_indices = @transform_9, window_bounds = array<i64: 1, 32>}, {pipeline_mode = #tpu.pipeline_mode<synchronous>, transform_indices = @transform_10, window_bounds = array<i64: 1, 32>}, {pipeline_mode = #tpu.pipeline_mode<synchronous>, transform_indices = @transform_11, window_bounds = array<i64: 1, 32>}, {pipeline_mode = #tpu.pipeline_mode<synchronous>, transform_indices = @transform_12, window_bounds = array<i64: 32, 128>}, {pipeline_mode = #tpu.pipeline_mode<synchronous>, transform_indices = @transform_13, window_bounds = array<i64: 1, 128>}, {pipeline_mode = #tpu.pipeline_mode<synchronous>, transform_indices = @transform_14, window_bounds = array<i64: 128, 32>}, {pipeline_mode = #tpu.pipeline_mode<synchronous>, transform_indices = @transform_15, window_bounds = array<i64: 1, 32>}, {pipeline_mode = #tpu.pipeline_mode<synchronous>, transform_indices = @transform_16, window_bounds = array<i64: 1, 32>}, {pipeline_mode = #tpu.pipeline_mode<synchronous>, transform_indices = @transform_17, window_bounds = array<i64: 1, 32>}, {pipeline_mode = #tpu.pipeline_mode<synchronous>, transform_indices = @transform_18, window_bounds = array<i64: 32, 96>}, {pipeline_mode = #tpu.pipeline_mode<synchronous>, transform_indices = @transform_19, window_bounds = array<i64: 1, 96>}, {pipeline_mode = #tpu.pipeline_mode<synchronous>, transform_indices = @transform_20, window_bounds = array<i64: 32, 32>}, {pipeline_mode = #tpu.pipeline_mode<synchronous>, transform_indices = @transform_21, window_bounds = array<i64: 1, 32>}, {pipeline_mode = #tpu.pipeline_mode<synchronous>, transform_indices = @transform_22, window_bounds = array<i64: 1, 32>}, {pipeline_mode = #tpu.pipeline_mode<synchronous>, transform_indices = @transform_23, window_bounds = array<i64: 1, 32>}, {pipeline_mode = #tpu.pipeline_mode<synchronous>, transform_indices = @transform_24, window_bounds = array<i64: 32, 128>}, {pipeline_mode = #tpu.pipeline_mode<synchronous>, transform_indices = @transform_25, window_bounds = array<i64: 16, 128>}]} {
    %c0 = arith.constant 0 : index
    %c0_0 = arith.constant 0 : index
    %0 = vector.load %arg1[%c0, %c0_0] : memref<16x1xi32, #tpu.memory_space<vmem>>, vector<16x1xi32>
    %1 = tpu.iota {dimensions = array<i32: 1>} : vector<16x128xi32>
    %2 = vector.broadcast %0 : vector<16x1xi32> to vector<16x128xi32>
    %3 = arith.cmpi eq, %1, %2 : vector<16x128xi32>
    %4 = arith.extui %3 : vector<16x128xi1> to vector<16x128xi32>
    %5 = arith.sitofp %4 : vector<16x128xi32> to vector<16x128xf32>
    %c0_1 = arith.constant 0 : index
    %c0_2 = arith.constant 0 : index
    %6 = vector.load %arg3[%c0_1, %c0_2] : memref<128x32xf32, #tpu.memory_space<vmem>>, vector<128x32xf32>
    %cst = arith.constant dense<0.000000e+00> : vector<16x32xf32>
    %7 = tpu.matmul %5, %6, %cst {dimension_numbers = #tpu.dot_dimension_numbers<[1], [0], [0], [1], [0, 0, 1, 1], [], []>} : vector<16x128xf32>, vector<128x32xf32>, vector<16x32xf32> -> vector<16x32xf32>
    %c0_3 = arith.constant 0 : index
    %c0_4 = arith.constant 0 : index
    %8 = vector.load %arg4[%c0_3, %c0_4] : memref<16x32xf32, #tpu.memory_space<vmem>>, vector<16x32xf32>
    %9 = arith.addf %7, %8 : vector<16x32xf32>
    %c0_5 = arith.constant 0 : index
    %c0_6 = arith.constant 0 : index
    %10 = vector.load %arg5[%c0_5, %c0_6] : memref<1x32xf32, #tpu.memory_space<vmem>>, vector<1x32xf32>
    %c0_7 = arith.constant 0 : index
    %c0_8 = arith.constant 0 : index
    %11 = vector.load %arg6[%c0_7, %c0_8] : memref<1x32xf32, #tpu.memory_space<vmem>>, vector<1x32xf32>
    %cst_9 = arith.constant dense<0.000000e+00> : vector<16xf32>
    %12 = vector.multi_reduction <add>, %9, %cst_9 [1] : vector<16x32xf32> to vector<16xf32>
    %13 = vector.shape_cast %12 : vector<16xf32> to vector<16x1xf32>
    %cst_10 = arith.constant 3.200000e+01 : f32
    %14 = vector.broadcast %cst_10 : f32 to vector<16x1xf32>
    %15 = arith.divf %13, %14 : vector<16x1xf32>
    %16 = vector.broadcast %15 : vector<16x1xf32> to vector<16x32xf32>
    %17 = arith.subf %9, %16 : vector<16x32xf32>
    %18 = arith.mulf %17, %17 : vector<16x32xf32>
    %cst_11 = arith.constant dense<0.000000e+00> : vector<16xf32>
    %19 = vector.multi_reduction <add>, %18, %cst_11 [1] : vector<16x32xf32> to vector<16xf32>
    %20 = vector.shape_cast %19 : vector<16xf32> to vector<16x1xf32>
    %cst_12 = arith.constant 3.200000e+01 : f32
    %21 = vector.broadcast %cst_12 : f32 to vector<16x1xf32>
    %22 = arith.divf %20, %21 : vector<16x1xf32>
    %23 = vector.broadcast %15 : vector<16x1xf32> to vector<16x32xf32>
    %24 = arith.subf %9, %23 : vector<16x32xf32>
    %cst_13 = arith.constant 9.99999974E-6 : f32
    %25 = vector.broadcast %cst_13 : f32 to vector<16x1xf32>
    %26 = arith.addf %22, %25 : vector<16x1xf32>
    %27 = math.rsqrt %26 : vector<16x1xf32>
    %28 = vector.broadcast %27 : vector<16x1xf32> to vector<16x32xf32>
    %29 = arith.mulf %24, %28 : vector<16x32xf32>
    %30 = vector.broadcast %10 : vector<1x32xf32> to vector<16x32xf32>
    %31 = arith.mulf %29, %30 : vector<16x32xf32>
    %32 = vector.broadcast %11 : vector<1x32xf32> to vector<16x32xf32>
    %33 = arith.addf %31, %32 : vector<16x32xf32>
    %34 = tpu.iota {dimensions = array<i32: 0>} : vector<16x16xi32>
    %c3_i32 = arith.constant 3 : i32
    %35 = vector.broadcast %c3_i32 : i32 to vector<16x16xi32>
    %36 = arith.shrsi %34, %35 : vector<16x16xi32>
    %37 = tpu.iota {dimensions = array<i32: 1>} : vector<16x16xi32>
    %c3_i32_14 = arith.constant 3 : i32
    %38 = vector.broadcast %c3_i32_14 : i32 to vector<16x16xi32>
    %39 = arith.shrsi %37, %38 : vector<16x16xi32>
    %40 = arith.cmpi eq, %36, %39 : vector<16x16xi32>
    %c0_15 = arith.constant 0 : index
    %c0_16 = arith.constant 0 : index
    %41 = vector.load %arg2[%c0_15, %c0_16] : memref<1x16xf32, #tpu.memory_space<vmem>>, vector<1x16xf32>
    %cst_17 = arith.constant 5.000000e-01 : f32
    %42 = vector.broadcast %cst_17 : f32 to vector<1x16xf32>
    %43 = arith.cmpf ogt, %41, %42 : vector<1x16xf32>
    %44 = vector.broadcast %43 : vector<1x16xi1> to vector<16x16xi1>
    %45 = arith.andi %40, %44 : vector<16x16xi1>
    %cst_18 = arith.constant 0.000000e+00 : f32
    %cst_19 = arith.constant -1.000000e+09 : f32
    %46 = vector.broadcast %cst_18 : f32 to vector<16x16xf32>
    %47 = vector.broadcast %cst_19 : f32 to vector<16x16xf32>
    %48 = arith.select %45, %46, %47 : vector<16x16xi1>, vector<16x16xf32>
    %cst_20 = arith.constant 0.000000e+00 : f32
    %cst_21 = arith.constant -1.000000e+09 : f32
    %49 = vector.broadcast %cst_20 : f32 to vector<16x16xf32>
    %50 = vector.broadcast %cst_21 : f32 to vector<16x16xf32>
    %51 = arith.select %40, %49, %50 : vector<16x16xi1>, vector<16x16xf32>
    %c0_22 = arith.constant 0 : index
    %c0_23 = arith.constant 0 : index
    %52 = vector.load %arg7[%c0_22, %c0_23] : memref<32x96xf32, #tpu.memory_space<vmem>>, vector<32x96xf32>
    %c0_24 = arith.constant 0 : index
    %c0_25 = arith.constant 0 : index
    %53 = vector.load %arg8[%c0_24, %c0_25] : memref<1x96xf32, #tpu.memory_space<vmem>>, vector<1x96xf32>
    %c0_26 = arith.constant 0 : index
    %c0_27 = arith.constant 0 : index
    %54 = vector.load %arg9[%c0_26, %c0_27] : memref<32x32xf32, #tpu.memory_space<vmem>>, vector<32x32xf32>
    %c0_28 = arith.constant 0 : index
    %c0_29 = arith.constant 0 : index
    %55 = vector.load %arg10[%c0_28, %c0_29] : memref<1x32xf32, #tpu.memory_space<vmem>>, vector<1x32xf32>
    %cst_30 = arith.constant dense<0.000000e+00> : vector<16x96xf32>
    %56 = tpu.matmul %33, %52, %cst_30 {dimension_numbers = #tpu.dot_dimension_numbers<[1], [0], [0], [1], [0, 0, 1, 1], [], []>} : vector<16x32xf32>, vector<32x96xf32>, vector<16x96xf32> -> vector<16x96xf32>
    %57 = vector.broadcast %53 : vector<1x96xf32> to vector<16x96xf32>
    %58 = arith.addf %56, %57 : vector<16x96xf32>
    %59 = vector.extract_strided_slice %58 {offsets = [0, 0], sizes = [16, 32], strides = [1, 1]} : vector<16x96xf32> to vector<16x32xf32>
    %60 = vector.extract_strided_slice %58 {offsets = [0, 32], sizes = [16, 32], strides = [1, 1]} : vector<16x96xf32> to vector<16x32xf32>
    %61 = vector.extract_strided_slice %58 {offsets = [0, 64], sizes = [16, 32], strides = [1, 1]} : vector<16x96xf32> to vector<16x32xf32>
    %62 = vector.extract_strided_slice %59 {offsets = [0, 0], sizes = [16, 16], strides = [1, 1]} : vector<16x32xf32> to vector<16x16xf32>
    %63 = vector.extract_strided_slice %60 {offsets = [0, 0], sizes = [16, 16], strides = [1, 1]} : vector<16x32xf32> to vector<16x16xf32>
    %cst_31 = arith.constant dense<0.000000e+00> : vector<16x16xf32>
    %64 = tpu.matmul %62, %63, %cst_31 {dimension_numbers = #tpu.dot_dimension_numbers<[1], [1], [0], [0], [0, 0, 1, 0], [], []>} : vector<16x16xf32>, vector<16x16xf32>, vector<16x16xf32> -> vector<16x16xf32>
    %65 = arith.addf %64, %48 : vector<16x16xf32>
    %66 = vector.extract_strided_slice %59 {offsets = [0, 16], sizes = [16, 16], strides = [1, 1]} : vector<16x32xf32> to vector<16x16xf32>
    %67 = vector.extract_strided_slice %60 {offsets = [0, 16], sizes = [16, 16], strides = [1, 1]} : vector<16x32xf32> to vector<16x16xf32>
    %cst_32 = arith.constant dense<0.000000e+00> : vector<16x16xf32>
    %68 = tpu.matmul %66, %67, %cst_32 {dimension_numbers = #tpu.dot_dimension_numbers<[1], [1], [0], [0], [0, 0, 1, 0], [], []>} : vector<16x16xf32>, vector<16x16xf32>, vector<16x16xf32> -> vector<16x16xf32>
    %69 = arith.addf %68, %48 : vector<16x16xf32>
    %70 = tpu.concatenate %65, %69 in 0 : vector<16x16xf32>, vector<16x16xf32> -> vector<32x16xf32>
    %cst_33 = arith.constant dense<0xFF800000> : vector<32xf32>
    %71 = vector.multi_reduction <maximumf>, %70, %cst_33 [1] : vector<32x16xf32> to vector<32xf32>
    %72 = vector.shape_cast %71 : vector<32xf32> to vector<32x1xf32>
    %73 = vector.broadcast %72 : vector<32x1xf32> to vector<32x16xf32>
    %74 = arith.subf %70, %73 : vector<32x16xf32>
    %75 = math.exp %74 : vector<32x16xf32>
    %cst_34 = arith.constant dense<0.000000e+00> : vector<32xf32>
    %76 = vector.multi_reduction <add>, %75, %cst_34 [1] : vector<32x16xf32> to vector<32xf32>
    %77 = vector.shape_cast %76 : vector<32xf32> to vector<32x1xf32>
    %78 = vector.broadcast %77 : vector<32x1xf32> to vector<32x16xf32>
    %79 = arith.divf %75, %78 : vector<32x16xf32>
    %cst_35 = arith.constant 0.000000e+00 : f32
    %80 = vector.broadcast %cst_35 : f32 to vector<16x32xf32>
    %81 = vector.extract_strided_slice %79 {offsets = [0, 0], sizes = [16, 16], strides = [1, 1]} : vector<32x16xf32> to vector<16x16xf32>
    %82 = vector.extract_strided_slice %61 {offsets = [0, 0], sizes = [16, 16], strides = [1, 1]} : vector<16x32xf32> to vector<16x16xf32>
    %cst_36 = arith.constant dense<0.000000e+00> : vector<16x16xf32>
    %83 = tpu.matmul %81, %82, %cst_36 {dimension_numbers = #tpu.dot_dimension_numbers<[1], [0], [0], [1], [0, 0, 1, 1], [], []>} : vector<16x16xf32>, vector<16x16xf32>, vector<16x16xf32> -> vector<16x16xf32>
    %84 = vector.extract_strided_slice %54 {offsets = [0, 0], sizes = [16, 32], strides = [1, 1]} : vector<32x32xf32> to vector<16x32xf32>
    %cst_37 = arith.constant dense<0.000000e+00> : vector<16x32xf32>
    %85 = tpu.matmul %83, %84, %cst_37 {dimension_numbers = #tpu.dot_dimension_numbers<[1], [0], [0], [1], [0, 0, 1, 1], [], []>} : vector<16x16xf32>, vector<16x32xf32>, vector<16x32xf32> -> vector<16x32xf32>
    %86 = arith.addf %80, %85 : vector<16x32xf32>
    %87 = vector.extract_strided_slice %79 {offsets = [16, 0], sizes = [16, 16], strides = [1, 1]} : vector<32x16xf32> to vector<16x16xf32>
    %88 = vector.extract_strided_slice %61 {offsets = [0, 16], sizes = [16, 16], strides = [1, 1]} : vector<16x32xf32> to vector<16x16xf32>
    %cst_38 = arith.constant dense<0.000000e+00> : vector<16x16xf32>
    %89 = tpu.matmul %87, %88, %cst_38 {dimension_numbers = #tpu.dot_dimension_numbers<[1], [0], [0], [1], [0, 0, 1, 1], [], []>} : vector<16x16xf32>, vector<16x16xf32>, vector<16x16xf32> -> vector<16x16xf32>
    %90 = vector.extract_strided_slice %54 {offsets = [16, 0], sizes = [16, 32], strides = [1, 1]} : vector<32x32xf32> to vector<16x32xf32>
    %cst_39 = arith.constant dense<0.000000e+00> : vector<16x32xf32>
    %91 = tpu.matmul %89, %90, %cst_39 {dimension_numbers = #tpu.dot_dimension_numbers<[1], [0], [0], [1], [0, 0, 1, 1], [], []>} : vector<16x16xf32>, vector<16x32xf32>, vector<16x32xf32> -> vector<16x32xf32>
    %92 = arith.addf %86, %91 : vector<16x32xf32>
    %93 = vector.broadcast %55 : vector<1x32xf32> to vector<16x32xf32>
    %94 = arith.addf %92, %93 : vector<16x32xf32>
    %95 = arith.addf %33, %94 : vector<16x32xf32>
    %c0_40 = arith.constant 0 : index
    %c0_41 = arith.constant 0 : index
    %96 = vector.load %arg11[%c0_40, %c0_41] : memref<1x32xf32, #tpu.memory_space<vmem>>, vector<1x32xf32>
    %c0_42 = arith.constant 0 : index
    %c0_43 = arith.constant 0 : index
    %97 = vector.load %arg12[%c0_42, %c0_43] : memref<1x32xf32, #tpu.memory_space<vmem>>, vector<1x32xf32>
    %cst_44 = arith.constant dense<0.000000e+00> : vector<16xf32>
    %98 = vector.multi_reduction <add>, %95, %cst_44 [1] : vector<16x32xf32> to vector<16xf32>
    %99 = vector.shape_cast %98 : vector<16xf32> to vector<16x1xf32>
    %cst_45 = arith.constant 3.200000e+01 : f32
    %100 = vector.broadcast %cst_45 : f32 to vector<16x1xf32>
    %101 = arith.divf %99, %100 : vector<16x1xf32>
    %102 = vector.broadcast %101 : vector<16x1xf32> to vector<16x32xf32>
    %103 = arith.subf %95, %102 : vector<16x32xf32>
    %104 = arith.mulf %103, %103 : vector<16x32xf32>
    %cst_46 = arith.constant dense<0.000000e+00> : vector<16xf32>
    %105 = vector.multi_reduction <add>, %104, %cst_46 [1] : vector<16x32xf32> to vector<16xf32>
    %106 = vector.shape_cast %105 : vector<16xf32> to vector<16x1xf32>
    %cst_47 = arith.constant 3.200000e+01 : f32
    %107 = vector.broadcast %cst_47 : f32 to vector<16x1xf32>
    %108 = arith.divf %106, %107 : vector<16x1xf32>
    %109 = vector.broadcast %101 : vector<16x1xf32> to vector<16x32xf32>
    %110 = arith.subf %95, %109 : vector<16x32xf32>
    %cst_48 = arith.constant 9.99999974E-6 : f32
    %111 = vector.broadcast %cst_48 : f32 to vector<16x1xf32>
    %112 = arith.addf %108, %111 : vector<16x1xf32>
    %113 = math.rsqrt %112 : vector<16x1xf32>
    %114 = vector.broadcast %113 : vector<16x1xf32> to vector<16x32xf32>
    %115 = arith.mulf %110, %114 : vector<16x32xf32>
    %116 = vector.broadcast %96 : vector<1x32xf32> to vector<16x32xf32>
    %117 = arith.mulf %115, %116 : vector<16x32xf32>
    %118 = vector.broadcast %97 : vector<1x32xf32> to vector<16x32xf32>
    %119 = arith.addf %117, %118 : vector<16x32xf32>
    %c0_49 = arith.constant 0 : index
    %c0_50 = arith.constant 0 : index
    %120 = vector.load %arg13[%c0_49, %c0_50] : memref<32x128xf32, #tpu.memory_space<vmem>>, vector<32x128xf32>
    %cst_51 = arith.constant dense<0.000000e+00> : vector<16x128xf32>
    %121 = tpu.matmul %119, %120, %cst_51 {dimension_numbers = #tpu.dot_dimension_numbers<[1], [0], [0], [1], [0, 0, 1, 1], [], []>} : vector<16x32xf32>, vector<32x128xf32>, vector<16x128xf32> -> vector<16x128xf32>
    %c0_52 = arith.constant 0 : index
    %c0_53 = arith.constant 0 : index
    %122 = vector.load %arg14[%c0_52, %c0_53] : memref<1x128xf32, #tpu.memory_space<vmem>>, vector<1x128xf32>
    %123 = vector.broadcast %122 : vector<1x128xf32> to vector<16x128xf32>
    %124 = arith.addf %121, %123 : vector<16x128xf32>
    %125 = arith.mulf %124, %124 : vector<16x128xf32>
    %126 = arith.mulf %124, %125 : vector<16x128xf32>
    %cst_54 = arith.constant 4.471500e-02 : f32
    %127 = vector.broadcast %cst_54 : f32 to vector<16x128xf32>
    %128 = arith.mulf %127, %126 : vector<16x128xf32>
    %129 = arith.addf %124, %128 : vector<16x128xf32>
    %cst_55 = arith.constant 0.797884583 : f32
    %130 = vector.broadcast %cst_55 : f32 to vector<16x128xf32>
    %131 = arith.mulf %130, %129 : vector<16x128xf32>
    %132 = math.tanh %131 : vector<16x128xf32>
    %cst_56 = arith.constant 1.000000e+00 : f32
    %133 = vector.broadcast %cst_56 : f32 to vector<16x128xf32>
    %134 = arith.addf %133, %132 : vector<16x128xf32>
    %cst_57 = arith.constant 5.000000e-01 : f32
    %135 = vector.broadcast %cst_57 : f32 to vector<16x128xf32>
    %136 = arith.mulf %135, %134 : vector<16x128xf32>
    %137 = arith.mulf %124, %136 : vector<16x128xf32>
    %c0_58 = arith.constant 0 : index
    %c0_59 = arith.constant 0 : index
    %138 = vector.load %arg15[%c0_58, %c0_59] : memref<128x32xf32, #tpu.memory_space<vmem>>, vector<128x32xf32>
    %cst_60 = arith.constant dense<0.000000e+00> : vector<16x32xf32>
    %139 = tpu.matmul %137, %138, %cst_60 {dimension_numbers = #tpu.dot_dimension_numbers<[1], [0], [0], [1], [0, 0, 1, 1], [], []>} : vector<16x128xf32>, vector<128x32xf32>, vector<16x32xf32> -> vector<16x32xf32>
    %c0_61 = arith.constant 0 : index
    %c0_62 = arith.constant 0 : index
    %140 = vector.load %arg16[%c0_61, %c0_62] : memref<1x32xf32, #tpu.memory_space<vmem>>, vector<1x32xf32>
    %141 = vector.broadcast %140 : vector<1x32xf32> to vector<16x32xf32>
    %142 = arith.addf %139, %141 : vector<16x32xf32>
    %143 = arith.addf %119, %142 : vector<16x32xf32>
    %c0_63 = arith.constant 0 : index
    %c0_64 = arith.constant 0 : index
    %144 = vector.load %arg17[%c0_63, %c0_64] : memref<1x32xf32, #tpu.memory_space<vmem>>, vector<1x32xf32>
    %c0_65 = arith.constant 0 : index
    %c0_66 = arith.constant 0 : index
    %145 = vector.load %arg18[%c0_65, %c0_66] : memref<1x32xf32, #tpu.memory_space<vmem>>, vector<1x32xf32>
    %cst_67 = arith.constant dense<0.000000e+00> : vector<16xf32>
    %146 = vector.multi_reduction <add>, %143, %cst_67 [1] : vector<16x32xf32> to vector<16xf32>
    %147 = vector.shape_cast %146 : vector<16xf32> to vector<16x1xf32>
    %cst_68 = arith.constant 3.200000e+01 : f32
    %148 = vector.broadcast %cst_68 : f32 to vector<16x1xf32>
    %149 = arith.divf %147, %148 : vector<16x1xf32>
    %150 = vector.broadcast %149 : vector<16x1xf32> to vector<16x32xf32>
    %151 = arith.subf %143, %150 : vector<16x32xf32>
    %152 = arith.mulf %151, %151 : vector<16x32xf32>
    %cst_69 = arith.constant dense<0.000000e+00> : vector<16xf32>
    %153 = vector.multi_reduction <add>, %152, %cst_69 [1] : vector<16x32xf32> to vector<16xf32>
    %154 = vector.shape_cast %153 : vector<16xf32> to vector<16x1xf32>
    %cst_70 = arith.constant 3.200000e+01 : f32
    %155 = vector.broadcast %cst_70 : f32 to vector<16x1xf32>
    %156 = arith.divf %154, %155 : vector<16x1xf32>
    %157 = vector.broadcast %149 : vector<16x1xf32> to vector<16x32xf32>
    %158 = arith.subf %143, %157 : vector<16x32xf32>
    %cst_71 = arith.constant 9.99999974E-6 : f32
    %159 = vector.broadcast %cst_71 : f32 to vector<16x1xf32>
    %160 = arith.addf %156, %159 : vector<16x1xf32>
    %161 = math.rsqrt %160 : vector<16x1xf32>
    %162 = vector.broadcast %161 : vector<16x1xf32> to vector<16x32xf32>
    %163 = arith.mulf %158, %162 : vector<16x32xf32>
    %164 = vector.broadcast %144 : vector<1x32xf32> to vector<16x32xf32>
    %165 = arith.mulf %163, %164 : vector<16x32xf32>
    %166 = vector.broadcast %145 : vector<1x32xf32> to vector<16x32xf32>
    %167 = arith.addf %165, %166 : vector<16x32xf32>
    %c0_72 = arith.constant 0 : index
    %c0_73 = arith.constant 0 : index
    %168 = vector.load %arg19[%c0_72, %c0_73] : memref<32x96xf32, #tpu.memory_space<vmem>>, vector<32x96xf32>
    %c0_74 = arith.constant 0 : index
    %c0_75 = arith.constant 0 : index
    %169 = vector.load %arg20[%c0_74, %c0_75] : memref<1x96xf32, #tpu.memory_space<vmem>>, vector<1x96xf32>
    %c0_76 = arith.constant 0 : index
    %c0_77 = arith.constant 0 : index
    %170 = vector.load %arg21[%c0_76, %c0_77] : memref<32x32xf32, #tpu.memory_space<vmem>>, vector<32x32xf32>
    %c0_78 = arith.constant 0 : index
    %c0_79 = arith.constant 0 : index
    %171 = vector.load %arg22[%c0_78, %c0_79] : memref<1x32xf32, #tpu.memory_space<vmem>>, vector<1x32xf32>
    %cst_80 = arith.constant dense<0.000000e+00> : vector<16x96xf32>
    %172 = tpu.matmul %167, %168, %cst_80 {dimension_numbers = #tpu.dot_dimension_numbers<[1], [0], [0], [1], [0, 0, 1, 1], [], []>} : vector<16x32xf32>, vector<32x96xf32>, vector<16x96xf32> -> vector<16x96xf32>
    %173 = vector.broadcast %169 : vector<1x96xf32> to vector<16x96xf32>
    %174 = arith.addf %172, %173 : vector<16x96xf32>
    %175 = vector.extract_strided_slice %174 {offsets = [0, 0], sizes = [16, 32], strides = [1, 1]} : vector<16x96xf32> to vector<16x32xf32>
    %176 = vector.extract_strided_slice %174 {offsets = [0, 32], sizes = [16, 32], strides = [1, 1]} : vector<16x96xf32> to vector<16x32xf32>
    %177 = vector.extract_strided_slice %174 {offsets = [0, 64], sizes = [16, 32], strides = [1, 1]} : vector<16x96xf32> to vector<16x32xf32>
    %cst_81 = arith.constant dense<0.000000e+00> : vector<16x16xf32>
    %178 = tpu.matmul %175, %176, %cst_81 {dimension_numbers = #tpu.dot_dimension_numbers<[1], [1], [0], [0], [0, 0, 1, 0], [], []>} : vector<16x32xf32>, vector<16x32xf32>, vector<16x16xf32> -> vector<16x16xf32>
    %179 = arith.addf %178, %51 : vector<16x16xf32>
    %cst_82 = arith.constant dense<0xFF800000> : vector<16xf32>
    %180 = vector.multi_reduction <maximumf>, %179, %cst_82 [1] : vector<16x16xf32> to vector<16xf32>
    %181 = vector.shape_cast %180 : vector<16xf32> to vector<16x1xf32>
    %182 = vector.broadcast %181 : vector<16x1xf32> to vector<16x16xf32>
    %183 = arith.subf %179, %182 : vector<16x16xf32>
    %184 = math.exp %183 : vector<16x16xf32>
    %cst_83 = arith.constant dense<0.000000e+00> : vector<16xf32>
    %185 = vector.multi_reduction <add>, %184, %cst_83 [1] : vector<16x16xf32> to vector<16xf32>
    %186 = vector.shape_cast %185 : vector<16xf32> to vector<16x1xf32>
    %187 = vector.broadcast %186 : vector<16x1xf32> to vector<16x16xf32>
    %188 = arith.divf %184, %187 : vector<16x16xf32>
    %cst_84 = arith.constant 0.000000e+00 : f32
    %189 = vector.broadcast %cst_84 : f32 to vector<16x32xf32>
    %cst_85 = arith.constant dense<0.000000e+00> : vector<16x32xf32>
    %190 = tpu.matmul %188, %177, %cst_85 {dimension_numbers = #tpu.dot_dimension_numbers<[1], [0], [0], [1], [0, 0, 1, 1], [], []>} : vector<16x16xf32>, vector<16x32xf32>, vector<16x32xf32> -> vector<16x32xf32>
    %cst_86 = arith.constant dense<0.000000e+00> : vector<16x32xf32>
    %191 = tpu.matmul %190, %170, %cst_86 {dimension_numbers = #tpu.dot_dimension_numbers<[1], [0], [0], [1], [0, 0, 1, 1], [], []>} : vector<16x32xf32>, vector<32x32xf32>, vector<16x32xf32> -> vector<16x32xf32>
    %192 = arith.addf %189, %191 : vector<16x32xf32>
    %193 = vector.broadcast %171 : vector<1x32xf32> to vector<16x32xf32>
    %194 = arith.addf %192, %193 : vector<16x32xf32>
    %195 = arith.addf %167, %194 : vector<16x32xf32>
    %c0_87 = arith.constant 0 : index
    %c0_88 = arith.constant 0 : index
    %196 = vector.load %arg23[%c0_87, %c0_88] : memref<1x32xf32, #tpu.memory_space<vmem>>, vector<1x32xf32>
    %c0_89 = arith.constant 0 : index
    %c0_90 = arith.constant 0 : index
    %197 = vector.load %arg24[%c0_89, %c0_90] : memref<1x32xf32, #tpu.memory_space<vmem>>, vector<1x32xf32>
    %cst_91 = arith.constant dense<0.000000e+00> : vector<16xf32>
    %198 = vector.multi_reduction <add>, %195, %cst_91 [1] : vector<16x32xf32> to vector<16xf32>
    %199 = vector.shape_cast %198 : vector<16xf32> to vector<16x1xf32>
    %cst_92 = arith.constant 3.200000e+01 : f32
    %200 = vector.broadcast %cst_92 : f32 to vector<16x1xf32>
    %201 = arith.divf %199, %200 : vector<16x1xf32>
    %202 = vector.broadcast %201 : vector<16x1xf32> to vector<16x32xf32>
    %203 = arith.subf %195, %202 : vector<16x32xf32>
    %204 = arith.mulf %203, %203 : vector<16x32xf32>
    %cst_93 = arith.constant dense<0.000000e+00> : vector<16xf32>
    %205 = vector.multi_reduction <add>, %204, %cst_93 [1] : vector<16x32xf32> to vector<16xf32>
    %206 = vector.shape_cast %205 : vector<16xf32> to vector<16x1xf32>
    %cst_94 = arith.constant 3.200000e+01 : f32
    %207 = vector.broadcast %cst_94 : f32 to vector<16x1xf32>
    %208 = arith.divf %206, %207 : vector<16x1xf32>
    %209 = vector.broadcast %201 : vector<16x1xf32> to vector<16x32xf32>
    %210 = arith.subf %195, %209 : vector<16x32xf32>
    %cst_95 = arith.constant 9.99999974E-6 : f32
    %211 = vector.broadcast %cst_95 : f32 to vector<16x1xf32>
    %212 = arith.addf %208, %211 : vector<16x1xf32>
    %213 = math.rsqrt %212 : vector<16x1xf32>
    %214 = vector.broadcast %213 : vector<16x1xf32> to vector<16x32xf32>
    %215 = arith.mulf %210, %214 : vector<16x32xf32>
    %216 = vector.broadcast %196 : vector<1x32xf32> to vector<16x32xf32>
    %217 = arith.mulf %215, %216 : vector<16x32xf32>
    %218 = vector.broadcast %197 : vector<1x32xf32> to vector<16x32xf32>
    %219 = arith.addf %217, %218 : vector<16x32xf32>
    %c0_96 = arith.constant 0 : index
    %c0_97 = arith.constant 0 : index
    %220 = vector.load %arg25[%c0_96, %c0_97] : memref<32x128xf32, #tpu.memory_space<vmem>>, vector<32x128xf32>
    %cst_98 = arith.constant dense<0.000000e+00> : vector<16x128xf32>
    %221 = tpu.matmul %219, %220, %cst_98 {dimension_numbers = #tpu.dot_dimension_numbers<[1], [0], [0], [1], [0, 0, 1, 1], [], []>} : vector<16x32xf32>, vector<32x128xf32>, vector<16x128xf32> -> vector<16x128xf32>
    %c0_99 = arith.constant 0 : index
    %c0_100 = arith.constant 0 : index
    %222 = vector.load %arg26[%c0_99, %c0_100] : memref<16x128xf32, #tpu.memory_space<vmem>>, vector<16x128xf32>
    tpu.vector_store %arg26[%c0_99, %c0_100], %221 {strides = array<i32>} : memref<16x128xf32, #tpu.memory_space<vmem>>, vector<16x128xf32>,
    return
  }
  func.func @transform_0(%arg0: i32) -> (i32, i32) {
    %c0_i32 = arith.constant 0 : i32
    %c0_i32_0 = arith.constant 0 : i32
    %c0_i32_1 = arith.constant 0 : i32
    return %c0_i32, %c0_i32_0 : i32, i32
  }
  func.func @transform_1(%arg0: i32) -> (i32, i32) {
    %c0_i32 = arith.constant 0 : i32
    %c0_i32_0 = arith.constant 0 : i32
    %c0_i32_1 = arith.constant 0 : i32
    return %c0_i32, %c0_i32_0 : i32, i32
  }
  func.func @transform_2(%arg0: i32) -> (i32, i32) {
    %c0_i32 = arith.constant 0 : i32
    %c0_i32_0 = arith.constant 0 : i32
    %c0_i32_1 = arith.constant 0 : i32
    return %c0_i32, %c0_i32_0 : i32, i32
  }
  func.func @transform_3(%arg0: i32) -> (i32, i32) {
    %c0_i32 = arith.constant 0 : i32
    %c0_i32_0 = arith.constant 0 : i32
    %c0_i32_1 = arith.constant 0 : i32
    return %c0_i32, %c0_i32_0 : i32, i32
  }
  func.func @transform_4(%arg0: i32) -> (i32, i32) {
    %c0_i32 = arith.constant 0 : i32
    %c0_i32_0 = arith.constant 0 : i32
    %c0_i32_1 = arith.constant 0 : i32
    return %c0_i32, %c0_i32_0 : i32, i32
  }
  func.func @transform_5(%arg0: i32) -> (i32, i32) {
    %c0_i32 = arith.constant 0 : i32
    %c0_i32_0 = arith.constant 0 : i32
    %c0_i32_1 = arith.constant 0 : i32
    return %c0_i32, %c0_i32_0 : i32, i32
  }
  func.func @transform_6(%arg0: i32) -> (i32, i32) {
    %c0_i32 = arith.constant 0 : i32
    %c0_i32_0 = arith.constant 0 : i32
    %c0_i32_1 = arith.constant 0 : i32
    return %c0_i32, %c0_i32_0 : i32, i32
  }
  func.func @transform_7(%arg0: i32) -> (i32, i32) {
    %c0_i32 = arith.constant 0 : i32
    %c0_i32_0 = arith.constant 0 : i32
    %c0_i32_1 = arith.constant 0 : i32
    return %c0_i32, %c0_i32_0 : i32, i32
  }
  func.func @transform_8(%arg0: i32) -> (i32, i32) {
    %c0_i32 = arith.constant 0 : i32
    %c0_i32_0 = arith.constant 0 : i32
    %c0_i32_1 = arith.constant 0 : i32
    return %c0_i32, %c0_i32_0 : i32, i32
  }
  func.func @transform_9(%arg0: i32) -> (i32, i32) {
    %c0_i32 = arith.constant 0 : i32
    %c0_i32_0 = arith.constant 0 : i32
    %c0_i32_1 = arith.constant 0 : i32
    return %c0_i32, %c0_i32_0 : i32, i32
  }
  func.func @transform_10(%arg0: i32) -> (i32, i32) {
    %c0_i32 = arith.constant 0 : i32
    %c0_i32_0 = arith.constant 0 : i32
    %c0_i32_1 = arith.constant 0 : i32
    return %c0_i32, %c0_i32_0 : i32, i32
  }
  func.func @transform_11(%arg0: i32) -> (i32, i32) {
    %c0_i32 = arith.constant 0 : i32
    %c0_i32_0 = arith.constant 0 : i32
    %c0_i32_1 = arith.constant 0 : i32
    return %c0_i32, %c0_i32_0 : i32, i32
  }
  func.func @transform_12(%arg0: i32) -> (i32, i32) {
    %c0_i32 = arith.constant 0 : i32
    %c0_i32_0 = arith.constant 0 : i32
    %c0_i32_1 = arith.constant 0 : i32
    return %c0_i32, %c0_i32_0 : i32, i32
  }
  func.func @transform_13(%arg0: i32) -> (i32, i32) {
    %c0_i32 = arith.constant 0 : i32
    %c0_i32_0 = arith.constant 0 : i32
    %c0_i32_1 = arith.constant 0 : i32
    return %c0_i32, %c0_i32_0 : i32, i32
  }
  func.func @transform_14(%arg0: i32) -> (i32, i32) {
    %c0_i32 = arith.constant 0 : i32
    %c0_i32_0 = arith.constant 0 : i32
    %c0_i32_1 = arith.constant 0 : i32
    return %c0_i32, %c0_i32_0 : i32, i32
  }
  func.func @transform_15(%arg0: i32) -> (i32, i32) {
    %c0_i32 = arith.constant 0 : i32
    %c0_i32_0 = arith.constant 0 : i32
    %c0_i32_1 = arith.constant 0 : i32
    return %c0_i32, %c0_i32_0 : i32, i32
  }
  func.func @transform_16(%arg0: i32) -> (i32, i32) {
    %c0_i32 = arith.constant 0 : i32
    %c0_i32_0 = arith.constant 0 : i32
    %c0_i32_1 = arith.constant 0 : i32
    return %c0_i32, %c0_i32_0 : i32, i32
  }
  func.func @transform_17(%arg0: i32) -> (i32, i32) {
    %c0_i32 = arith.constant 0 : i32
    %c0_i32_0 = arith.constant 0 : i32
    %c0_i32_1 = arith.constant 0 : i32
    return %c0_i32, %c0_i32_0 : i32, i32
  }
  func.func @transform_18(%arg0: i32) -> (i32, i32) {
    %c0_i32 = arith.constant 0 : i32
    %c0_i32_0 = arith.constant 0 : i32
    %c0_i32_1 = arith.constant 0 : i32
    return %c0_i32, %c0_i32_0 : i32, i32
  }
  func.func @transform_19(%arg0: i32) -> (i32, i32) {
    %c0_i32 = arith.constant 0 : i32
    %c0_i32_0 = arith.constant 0 : i32
    %c0_i32_1 = arith.constant 0 : i32
    return %c0_i32, %c0_i32_0 : i32, i32
  }
  func.func @transform_20(%arg0: i32) -> (i32, i32) {
    %c0_i32 = arith.constant 0 : i32
    %c0_i32_0 = arith.constant 0 : i32
    %c0_i32_1 = arith.constant 0 : i32
    return %c0_i32, %c0_i32_0 : i32, i32
  }
  func.func @transform_21(%arg0: i32) -> (i32, i32) {
    %c0_i32 = arith.constant 0 : i32
    %c0_i32_0 = arith.constant 0 : i32
    %c0_i32_1 = arith.constant 0 : i32
    return %c0_i32, %c0_i32_0 : i32, i32
  }
  func.func @transform_22(%arg0: i32) -> (i32, i32) {
    %c0_i32 = arith.constant 0 : i32
    %c0_i32_0 = arith.constant 0 : i32
    %c0_i32_1 = arith.constant 0 : i32
    return %c0_i32, %c0_i32_0 : i32, i32
  }
  func.func @transform_23(%arg0: i32) -> (i32, i32) {
    %c0_i32 = arith.constant 0 : i32
    %c0_i32_0 = arith.constant 0 : i32
    %c0_i32_1 = arith.constant 0 : i32
    return %c0_i32, %c0_i32_0 : i32, i32
  }
  func.func @transform_24(%arg0: i32) -> (i32, i32) {
    %c0_i32 = arith.constant 0 : i32
    %c0_i32_0 = arith.constant 0 : i32
    %c0_i32_1 = arith.constant 0 : i32
    return %c0_i32, %c0_i32_0 : i32, i32
  }
  func.func @transform_25(%arg0: i32) -> (i32, i32) {
    %c0_i32 = arith.constant 0 : i32
    %c0_i32_0 = arith.constant 0 : i32
    %c0_i32_1 = arith.constant 0 : i32
    return %c0_i32, %c0_i32_0 : i32, i32
  }
}

</mosaic_0001>

<llo_original>
// kernel: forward.1
$region0: #{forward.1}
  #allocation0 [shape = 'u32[]', space=smem, size = 0x4, offset = 0x4, fixed_abs, tag = 'smem constant byte address 0x4 - core index']
  #allocation1 [shape = 'u32[72,128]{1,0:T(1,128)}', space=vmem, size = 0x9000, scoped, tag = 'internal scratch']
  %s0 = inlined_call_operand.vmem [shape: s32[16,1], index: 0, kind: input, shape index: {}]
  %s1 = inlined_call_operand.vmem [shape: f32[1,16], index: 1, kind: input, shape index: {}]
  %s2 = inlined_call_operand.vmem [shape: f32[128,32], index: 2, kind: input, shape index: {}]
  %s3 = inlined_call_operand.vmem [shape: f32[16,32], index: 3, kind: input, shape index: {}]
  %s4 = inlined_call_operand.vmem [shape: f32[1,32], index: 4, kind: input, shape index: {}]
  %s5 = inlined_call_operand.vmem [shape: f32[1,32], index: 5, kind: input, shape index: {}]
  %s6 = inlined_call_operand.vmem [shape: f32[32,96], index: 6, kind: input, shape index: {}]
  %s7 = inlined_call_operand.vmem [shape: f32[1,96], index: 7, kind: input, shape index: {}]
  %s8 = inlined_call_operand.vmem [shape: f32[32,32], index: 8, kind: input, shape index: {}]
  %s9 = inlined_call_operand.vmem [shape: f32[1,32], index: 9, kind: input, shape index: {}]
  %s10 = inlined_call_operand.vmem [shape: f32[1,32], index: 10, kind: input, shape index: {}]
  %s11 = inlined_call_operand.vmem [shape: f32[1,32], index: 11, kind: input, shape index: {}]
  %s12 = inlined_call_operand.vmem [shape: f32[32,128], index: 12, kind: input, shape index: {}]
  %s13 = inlined_call_operand.vmem [shape: f32[1,128], index: 13, kind: input, shape index: {}]
  %s14 = inlined_call_operand.vmem [shape: f32[128,32], index: 14, kind: input, shape index: {}]
  %s15 = inlined_call_operand.vmem [shape: f32[1,32], index: 15, kind: input, shape index: {}]
  %s16 = inlined_call_operand.vmem [shape: f32[1,32], index: 16, kind: input, shape index: {}]
  %s17 = inlined_call_operand.vmem [shape: f32[1,32], index: 17, kind: input, shape index: {}]
  %s18 = inlined_call_operand.vmem [shape: f32[32,96], index: 18, kind: input, shape index: {}]
  %s19 = inlined_call_operand.vmem [shape: f32[1,96], index: 19, kind: input, shape index: {}]
  %s20 = inlined_call_operand.vmem [shape: f32[32,32], index: 20, kind: input, shape index: {}]
  %s21 = inlined_call_operand.vmem [shape: f32[1,32], index: 21, kind: input, shape index: {}]
  %s22 = inlined_call_operand.vmem [shape: f32[1,32], index: 22, kind: input, shape index: {}]
  %s23 = inlined_call_operand.vmem [shape: f32[1,32], index: 23, kind: input, shape index: {}]
  %s24 = inlined_call_operand.vmem [shape: f32[32,128], index: 24, kind: input, shape index: {}]
  %s25 = inlined_call_operand.vmem [shape: f32[16,128], index: 25, kind: output, shape index: {}]
  %s26 = sld [smem:[#allocation0]]
  $region110: #{forward.1} parent=0
    _
  %s28 = ssub.s32 1, %s26
  %s29 = scalar_select 0, %s28, %s26
  // Predicated region
  $region2: #{forward.1} parent=0 // pred_check
    _
  $region3: #{forward.1} parent=0 // pred_check_branch
    %31 = sbr.rel (0) target = $region5
  $region4: #{forward.1} parent=0 // pred_region
    _
  $region5: #{forward.1} parent=0 // pred_fallthru
    _
  // Predicated region
  $region6: #{forward.1} parent=0 // pred_check
    _
  $region7: #{forward.1} parent=0 // pred_check_branch
    %33 = sbr.rel (0) target = $region9
  $region8: #{forward.1} parent=0 // pred_region
    _
  $region9: #{forward.1} parent=0 // pred_fallthru
    _
  // Predicated region
  $region10: #{forward.1} parent=0 // pred_check
    _
  $region11: #{forward.1} parent=0 // pred_check_branch
    %35 = sbr.rel (0) target = $region13
  $region12: #{forward.1} parent=0 // pred_region
    _
  $region13: #{forward.1} parent=0 // pred_fallthru
    _
  // Predicated region
  $region14: #{forward.1} parent=0 // pred_check
    _
  $region15: #{forward.1} parent=0 // pred_check_branch
    %37 = sbr.rel (0) target = $region17
  $region16: #{forward.1} parent=0 // pred_region
    _
  $region17: #{forward.1} parent=0 // pred_fallthru
    _
  // Predicated region
  $region18: #{forward.1} parent=0 // pred_check
    _
  $region19: #{forward.1} parent=0 // pred_check_branch
    %39 = sbr.rel (0) target = $region21
  $region20: #{forward.1} parent=0 // pred_region
    _
  $region21: #{forward.1} parent=0 // pred_fallthru
    _
  // Predicated region
  $region22: #{forward.1} parent=0 // pred_check
    _
  $region23: #{forward.1} parent=0 // pred_check_branch
    %41 = sbr.rel (0) target = $region25
  $region24: #{forward.1} parent=0 // pred_region
    _
  $region25: #{forward.1} parent=0 // pred_fallthru
    _
  // Predicated region
  $region26: #{forward.1} parent=0 // pred_check
    _
  $region27: #{forward.1} parent=0 // pred_check_branch
    %43 = sbr.rel (0) target = $region29
  $region28: #{forward.1} parent=0 // pred_region
    _
  $region29: #{forward.1} parent=0 // pred_fallthru
    _
  // Predicated region
  $region30: #{forward.1} parent=0 // pred_check
    _
  $region31: #{forward.1} parent=0 // pred_check_branch
    %45 = sbr.rel (0) target = $region33
  $region32: #{forward.1} parent=0 // pred_region
    _
  $region33: #{forward.1} parent=0 // pred_fallthru
    _
  // Predicated region
  $region34: #{forward.1} parent=0 // pred_check
    _
  $region35: #{forward.1} parent=0 // pred_check_branch
    %47 = sbr.rel (0) target = $region37
  $region36: #{forward.1} parent=0 // pred_region
    _
  $region37: #{forward.1} parent=0 // pred_fallthru
    _
  // Predicated region
  $region38: #{forward.1} parent=0 // pred_check
    _
  $region39: #{forward.1} parent=0 // pred_check_branch
    %49 = sbr.rel (0) target = $region41
  $region40: #{forward.1} parent=0 // pred_region
    _
  $region41: #{forward.1} parent=0 // pred_fallthru
    _
  // Predicated region
  $region42: #{forward.1} parent=0 // pred_check
    _
  $region43: #{forward.1} parent=0 // pred_check_branch
    %51 = sbr.rel (0) target = $region45
  $region44: #{forward.1} parent=0 // pred_region
    _
  $region45: #{forward.1} parent=0 // pred_fallthru
    _
  // Predicated region
  $region46: #{forward.1} parent=0 // pred_check
    _
  $region47: #{forward.1} parent=0 // pred_check_branch
    %53 = sbr.rel (0) target = $region49
  $region48: #{forward.1} parent=0 // pred_region
    _
  $region49: #{forward.1} parent=0 // pred_fallthru
    _
  // Predicated region
  $region50: #{forward.1} parent=0 // pred_check
    _
  $region51: #{forward.1} parent=0 // pred_check_branch
    %55 = sbr.rel (0) target = $region53
  $region52: #{forward.1} parent=0 // pred_region
    _
  $region53: #{forward.1} parent=0 // pred_fallthru
    _
  // Predicated region
  $region54: #{forward.1} parent=0 // pred_check
    _
  $region55: #{forward.1} parent=0 // pred_check_branch
    %57 = sbr.rel (0) target = $region57
  $region56: #{forward.1} parent=0 // pred_region
    _
  $region57: #{forward.1} parent=0 // pred_fallthru
    _
  // Predicated region
  $region58: #{forward.1} parent=0 // pred_check
    _
  $region59: #{forward.1} parent=0 // pred_check_branch
    %59 = sbr.rel (0) target = $region61
  $region60: #{forward.1} parent=0 // pred_region
    _
  $region61: #{forward.1} parent=0 // pred_fallthru
    _
  // Predicated region
  $region62: #{forward.1} parent=0 // pred_check
    _
  $region63: #{forward.1} parent=0 // pred_check_branch
    %61 = sbr.rel (0) target = $region65
  $region64: #{forward.1} parent=0 // pred_region
    _
  $region65: #{forward.1} parent=0 // pred_fallthru
    _
  // Predicated region
  $region66: #{forward.1} parent=0 // pred_check
    _
  $region67: #{forward.1} parent=0 // pred_check_branch
    %63 = sbr.rel (0) target = $region69
  $region68: #{forward.1} parent=0 // pred_region
    _
  $region69: #{forward.1} parent=0 // pred_fallthru
    _
  // Predicated region
  $region70: #{forward.1} parent=0 // pred_check
    _
  $region71: #{forward.1} parent=0 // pred_check_branch
    %65 = sbr.rel (0) target = $region73
  $region72: #{forward.1} parent=0 // pred_region
    _
  $region73: #{forward.1} parent=0 // pred_fallthru
    _
  // Predicated region
  $region74: #{forward.1} parent=0 // pred_check
    _
  $region75: #{forward.1} parent=0 // pred_check_branch
    %67 = sbr.rel (0) target = $region77
  $region76: #{forward.1} parent=0 // pred_region
    _
  $region77: #{forward.1} parent=0 // pred_fallthru
    _
  // Predicated region
  $region78: #{forward.1} parent=0 // pred_check
    _
  $region79: #{forward.1} parent=0 // pred_check_branch
    %69 = sbr.rel (0) target = $region81
  $region80: #{forward.1} parent=0 // pred_region
    _
  $region81: #{forward.1} parent=0 // pred_fallthru
    _
  // Predicated region
  $region82: #{forward.1} parent=0 // pred_check
    _
  $region83: #{forward.1} parent=0 // pred_check_branch
    %71 = sbr.rel (0) target = $region85
  $region84: #{forward.1} parent=0 // pred_region
    _
  $region85: #{forward.1} parent=0 // pred_fallthru
    _
  // Predicated region
  $region86: #{forward.1} parent=0 // pred_check
    _
  $region87: #{forward.1} parent=0 // pred_check_branch
    %73 = sbr.rel (0) target = $region89
  $region88: #{forward.1} parent=0 // pred_region
    _
  $region89: #{forward.1} parent=0 // pred_fallthru
    _
  // Predicated region
  $region90: #{forward.1} parent=0 // pred_check
    _
  $region91: #{forward.1} parent=0 // pred_check_branch
    %75 = sbr.rel (0) target = $region93
  $region92: #{forward.1} parent=0 // pred_region
    _
  $region93: #{forward.1} parent=0 // pred_fallthru
    _
  // Predicated region
  $region94: #{forward.1} parent=0 // pred_check
    _
  $region95: #{forward.1} parent=0 // pred_check_branch
    %77 = sbr.rel (0) target = $region97
  $region96: #{forward.1} parent=0 // pred_region
    _
  $region97: #{forward.1} parent=0 // pred_fallthru
    _
  // Predicated region
  $region98: #{forward.1} parent=0 // pred_check
    _
  $region99: #{forward.1} parent=0 // pred_check_branch
    %79 = sbr.rel (0) target = $region101
  $region100: #{forward.1} parent=0 // pred_region
    _
  $region101: #{forward.1} parent=0 // pred_fallthru
    _
  %v80 = vld [vmem:[%s0] sm:$0xff]
  %v81 = vld [vmem:[%s0 + $0x8] sm:$0xff]
  %v82 = vlaneseq
  %v83 = vand.u32 %v82, 127
  %84 = vset.pattern.permute.xlu0 0
  %85 = vperm.xlu0 %84, %v80
  %v86 = vpop.permute.xlu0 %85
  %87 = vset.pattern.permute.xlu0 0
  %88 = vperm.xlu0 %87, %v81
  %v89 = vpop.permute.xlu0 %88
  %vm90 = vcmp.eq.s32.totalorder %v83, %v86
  %vm91 = vcmp.eq.s32.totalorder %v83, %v89
  %v92 = vsel %vm90, 1, 0
  %v93 = vsel %vm91, 1, 0
  %v94 = vcvt.s32.f32 %v92
  %v95 = vcvt.s32.f32 %v93
  %v96 = vld [vmem:[%s2] sm:$0xff]
  %v97 = vld [vmem:[%s2 + $0x8] sm:$0xff]
  %v98 = vld [vmem:[%s2 + $0x10] sm:$0xff]
  %v99 = vld [vmem:[%s2 + $0x18] sm:$0xff]
  %v100 = vld [vmem:[%s2 + $0x20] sm:$0xff]
  %v101 = vld [vmem:[%s2 + $0x28] sm:$0xff]
  %v102 = vld [vmem:[%s2 + $0x30] sm:$0xff]
  %v103 = vld [vmem:[%s2 + $0x38] sm:$0xff]
  %v104 = vld [vmem:[%s2 + $0x40] sm:$0xff]
  %v105 = vld [vmem:[%s2 + $0x48] sm:$0xff]
  %v106 = vld [vmem:[%s2 + $0x50] sm:$0xff]
  %v107 = vld [vmem:[%s2 + $0x58] sm:$0xff]
  %v108 = vld [vmem:[%s2 + $0x60] sm:$0xff]
  %v109 = vld [vmem:[%s2 + $0x68] sm:$0xff]
  %v110 = vld [vmem:[%s2 + $0x70] sm:$0xff]
  %v111 = vld [vmem:[%s2 + $0x78] sm:$0xff]
  %v112 = vld [vmem:[%s3] sm:$0xff]
  %v113 = vld [vmem:[%s3 + $0x8] sm:$0xff]
  %114 = vmatpush.msra.mxu0 %v111
  %115 = vmatpush.msra.mxu0 %v110
  %116 = vmatpush.msra.mxu0 %v109
  %117 = vmatpush.msra.mxu0 %v108
  %118 = vmatpush.msra.mxu0 %v107
  %119 = vmatpush.msra.mxu0 %v106
  %120 = vmatpush.msra.mxu0 %v105
  %121 = vmatpush.msra.mxu0 %v104
  %122 = vmatpush.msra.mxu0 %v103
  %123 = vmatpush.msra.mxu0 %v102
  %124 = vmatpush.msra.mxu0 %v101
  %125 = vmatpush.msra.mxu0 %v100
  %126 = vmatpush.msra.mxu0 %v99
  %127 = vmatpush.msra.mxu0 %v98
  %128 = vmatpush.msra.mxu0 %v97
  %129 = vmatpush.msra.mxu0 %v96
  %130 = vmatmul.f32.gmra.mxu0 %v94
  %v131 = vpop.f32.mrf.mxu0
  %v132 = vadd.f32 %v112, %v131
  %133 = vmatmul.f32.gmra.mxu0 %v95
  %v134 = vpop.f32.mrf.mxu0
  %v135 = vadd.f32 %v113, %v134
  %136 = vdwg.mxu0
  %v137 = vld [vmem:[%s4] sm:$0x1]
  %v138 = vld [vmem:[%s5] sm:$0x1]
  %vm139 = vcmask 261120
  %v140 = vsel %vm139, %v132, 0.0
  %141 = vadd.xlane.f32.xlu0 %v140
  %v142 = vpop.xlane.xlu0 %141
  %v143 = vsel %vm139, %v135, 0.0
  %144 = vadd.xlane.f32.xlu0 %v143
  %v145 = vpop.xlane.xlu0 %144
  %v146 = vrcp.pop 32.0
  %v147 = vmul.f32 32.0, %v146
  %v148 = vsub.f32 1.0, %v147
  %v149 = vmul.f32 %v146, %v148
  %v150 = vadd.f32 %v146, %v149
  %vm151 = vweird.f32 %v146
  %v152 = vsel %vm151, %v146, %v150
  %v153 = vmul.f32 %v142, %v152
  %v154 = vmul.f32 %v145, %v152
  %v155 = vsub.f32 %v132, %v153
  %v156 = vsub.f32 %v135, %v154
  %v157 = vmul.f32 %v155, %v155
  %v158 = vmul.f32 %v156, %v156
  %v159 = vsel %vm139, %v157, 0.0
  %160 = vadd.xlane.f32.xlu0 %v159
  %v161 = vpop.xlane.xlu0 %160
  %v162 = vsel %vm139, %v158, 0.0
  %163 = vadd.xlane.f32.xlu0 %v162
  %v164 = vpop.xlane.xlu0 %163
  %v165 = vmul.f32 %v161, %v152
  %v166 = vmul.f32 %v164, %v152
  %v167 = vadd.f32 %v165, 1e-05
  %v168 = vadd.f32 %v166, 1e-05
  %v169 = vrsqrt.pop %v167
  %v170 = vmul.f32 %v169, %v167
  %v171 = vmul.f32 %v170, %v169
  %v172 = vmul.f32 0.5, %v171
  %v173 = vsub.f32 1.5, %v172
  %v174 = vmul.f32 %v169, %v173
  %vm175 = vweird.f32 %v167
  %vm176 = vweird.f32 %v169
  %vm177 = vmor %vm175, %vm176
  %v178 = vsel %vm177, %v169, %v174
  %v179 = vrsqrt.pop %v168
  %v180 = vmul.f32 %v179, %v168
  %v181 = vmul.f32 %v180, %v179
  %v182 = vmul.f32 0.5, %v181
  %v183 = vsub.f32 1.5, %v182
  %v184 = vmul.f32 %v179, %v183
  %vm185 = vweird.f32 %v168
  %vm186 = vweird.f32 %v179
  %vm187 = vmor %vm185, %vm186
  %v188 = vsel %vm187, %v179, %v184
  %v189 = vmul.f32 %v155, %v178
  %v190 = vmul.f32 %v156, %v188
  %v192 = vperm.slane %v137, 0
  %v194 = vmul.f32 %v189, %v192
  %v195 = vmul.f32 %v190, %v192
  %v197 = vperm.slane %v138, 0
  %v199 = vadd.f32 %v194, %v197
  %v200 = vadd.f32 %v195, %v197
  %v201 = vlaneseq
  %v202 = vshrl.u32 %v201, 7
  %v203 = vadd.s32 %v202, 8
  %v204 = vshra.s32 %v202, 3
  %v205 = vshra.s32 %v203, 3
  %v206 = vshra.s32 %v83, 3
  %vm207 = vcmp.eq.s32.totalorder %v204, %v206
  %vm208 = vcmp.eq.s32.totalorder %v205, %v206
  %v209 = vld [vmem:[%s1] sm:$0x1]
  %vm210 = vcmp.gt.f32.partialorder %v209, 0.5
  %v211 = vsel %vm210, 1, 0
  %v212 = vperm.slane %v211, 0
  %vm213 = vcmp.eq.s32.totalorder %v212, 1
  %vm214 = vmand %vm207, %vm213
  %vm215 = vmand %vm208, %vm213
  %v216 = vsel %vm214, 0.0, -1e+09
  %v217 = vsel %vm215, 0.0, -1e+09
  %v218 = vsel %vm207, 0.0, -1e+09
  %v219 = vsel %vm208, 0.0, -1e+09
  %v220 = vld [vmem:[%s6] sm:$0xff]
  %v221 = vld [vmem:[%s6 + $0x8] sm:$0xff]
  %v222 = vld [vmem:[%s6 + $0x10] sm:$0xff]
  %v223 = vld [vmem:[%s6 + $0x18] sm:$0xff]
  %v224 = vld [vmem:[%s7] sm:$0x1]
  %v225 = vld [vmem:[%s8] sm:$0xff]
  %v226 = vld [vmem:[%s8 + $0x8] sm:$0xff]
  %v227 = vld [vmem:[%s8 + $0x10] sm:$0xff]
  %v228 = vld [vmem:[%s8 + $0x18] sm:$0xff]
  %v229 = vld [vmem:[%s9] sm:$0x1]
  %v231 = vperm.slane %v224, 0
  %v234 = vsel %vm139, %v199, 0
  %v237 = vsel %vm139, %v200, 0
  %239 = vmatpush.msra.mxu0 0.0
  %240 = vmatpush.msra.mxu0 0.0
  %241 = vmatpush.msra.mxu0 0.0
  %242 = vmatpush.msra.mxu0 0.0
  %243 = vmatpush.msra.mxu0 0.0
  %244 = vmatpush.msra.mxu0 0.0
  %245 = vmatpush.msra.mxu0 0.0
  %246 = vmatpush.msra.mxu0 0.0
  %247 = vmatpush.msra.mxu0 0.0
  %248 = vmatpush.msra.mxu0 0.0
  %249 = vmatpush.msra.mxu0 0.0
  %250 = vmatpush.msra.mxu0 0.0
  %251 = vmatpush.msra.mxu0 %v223
  %252 = vmatpush.msra.mxu0 %v222
  %253 = vmatpush.msra.mxu0 %v221
  %254 = vmatpush.msra.mxu0 %v220
  %255 = vmatmul.f32.gmra.mxu0 %v234
  %v256 = vpop.f32.mrf.mxu0
  %v257 = vadd.f32 %v231, %v256
  %258 = vmatmul.f32.gmra.mxu0 %v237
  %v259 = vpop.f32.mrf.mxu0
  %v260 = vadd.f32 %v231, %v259
  %261 = vdwg.mxu0
  %264 = vrot.lane.b32.xlu0 %v257, 96
  %v265 = vpop.permute.xlu0 %264
  %266 = vrot.lane.b32.xlu0 %v260, 96
  %v267 = vpop.permute.xlu0 %266
  %vm268 = vcmask 130048
  %v269 = vsel %vm268, %v257, 0
  %v271 = vsel %vm268, %v260, 0
  %v273 = vsel %vm268, %v265, 0
  %v275 = vsel %vm268, %v267, 0
  %277 = vmatpush.xpose.msra.mxu0 0.0
  %278 = vmatpush.xpose.msra.mxu0 0.0
  %279 = vmatpush.xpose.msra.mxu0 0.0
  %280 = vmatpush.xpose.msra.mxu0 0.0
  %281 = vmatpush.xpose.msra.mxu0 0.0
  %282 = vmatpush.xpose.msra.mxu0 0.0
  %283 = vmatpush.xpose.msra.mxu0 0.0
  %284 = vmatpush.xpose.msra.mxu0 0.0
  %285 = vmatpush.xpose.msra.mxu0 0.0
  %286 = vmatpush.xpose.msra.mxu0 0.0
  %287 = vmatpush.xpose.msra.mxu0 0.0
  %288 = vmatpush.xpose.msra.mxu0 0.0
  %289 = vmatpush.xpose.msra.mxu0 0.0
  %290 = vmatpush.xpose.msra.mxu0 0.0
  %291 = vmatpush.xpose.msra.mxu0 %v275
  %292 = vmatpush.xpose.msra.mxu0 %v273
  %293 = vmatmul.f32.gmra.mxu0 %v269
  %v294 = vpop.f32.mrf.mxu0
  %v295 = vadd.f32 %v216, %v294
  %296 = vmatmul.f32.gmra.mxu0 %v271
  %v297 = vpop.f32.mrf.mxu0
  %v298 = vadd.f32 %v217, %v297
  %299 = vdwg.mxu0
  %300 = vrot.lane.b32.xlu0 %v257, 112
  %v301 = vpop.permute.xlu0 %300
  %302 = vrot.lane.b32.xlu0 %v260, 112
  %v303 = vpop.permute.xlu0 %302
  %304 = vrot.lane.b32.xlu0 %v257, 80
  %v305 = vpop.permute.xlu0 %304
  %306 = vrot.lane.b32.xlu0 %v260, 80
  %v307 = vpop.permute.xlu0 %306
  %v308 = vsel %vm268, %v301, 0
  %v310 = vsel %vm268, %v303, 0
  %v312 = vsel %vm268, %v305, 0
  %v314 = vsel %vm268, %v307, 0
  %316 = vmatpush.xpose.msra.mxu0 0.0
  %317 = vmatpush.xpose.msra.mxu0 0.0
  %318 = vmatpush.xpose.msra.mxu0 0.0
  %319 = vmatpush.xpose.msra.mxu0 0.0
  %320 = vmatpush.xpose.msra.mxu0 0.0
  %321 = vmatpush.xpose.msra.mxu0 0.0
  %322 = vmatpush.xpose.msra.mxu0 0.0
  %323 = vmatpush.xpose.msra.mxu0 0.0
  %324 = vmatpush.xpose.msra.mxu0 0.0
  %325 = vmatpush.xpose.msra.mxu0 0.0
  %326 = vmatpush.xpose.msra.mxu0 0.0
  %327 = vmatpush.xpose.msra.mxu0 0.0
  %328 = vmatpush.xpose.msra.mxu0 0.0
  %329 = vmatpush.xpose.msra.mxu0 0.0
  %330 = vmatpush.xpose.msra.mxu0 %v314
  %331 = vmatpush.xpose.msra.mxu0 %v312
  %332 = vmatmul.f32.gmra.mxu0 %v308
  %v333 = vpop.f32.mrf.mxu0
  %v334 = vadd.f32 %v216, %v333
  %335 = vmatmul.f32.gmra.mxu0 %v310
  %v336 = vpop.f32.mrf.mxu0
  %v337 = vadd.f32 %v217, %v336
  %338 = vdwg.mxu0
  %v339 = vsel %vm268, %v295, -inf
  %340 = vmax.xlane.f32.xlu0 %v339
  %v341 = vpop.xlane.xlu0 %340
  %v342 = vsel %vm268, %v298, -inf
  %343 = vmax.xlane.f32.xlu0 %v342
  %v344 = vpop.xlane.xlu0 %343
  %v345 = vsel %vm268, %v334, -inf
  %346 = vmax.xlane.f32.xlu0 %v345
  %v347 = vpop.xlane.xlu0 %346
  %v348 = vsel %vm268, %v337, -inf
  %349 = vmax.xlane.f32.xlu0 %v348
  %v350 = vpop.xlane.xlu0 %349
  %v351 = vsub.f32 %v295, %v341
  %v352 = vsub.f32 %v298, %v344
  %v353 = vsub.f32 %v334, %v347
  %v354 = vsub.f32 %v337, %v350
  %v355 = vmul.f32 %v351, 1.442695
  %v356 = vpow.pop %v355
  %v357 = vmul.f32 %v352, 1.442695
  %v358 = vpow.pop %v357
  %v359 = vmul.f32 %v353, 1.442695
  %v360 = vpow.pop %v359
  %v361 = vmul.f32 %v354, 1.442695
  %v362 = vpow.pop %v361
  %v363 = vsel %vm268, %v356, 0.0
  %364 = vadd.xlane.f32.xlu0 %v363
  %v365 = vpop.xlane.xlu0 %364
  %v366 = vsel %vm268, %v358, 0.0
  %367 = vadd.xlane.f32.xlu0 %v366
  %v368 = vpop.xlane.xlu0 %367
  %v369 = vsel %vm268, %v360, 0.0
  %370 = vadd.xlane.f32.xlu0 %v369
  %v371 = vpop.xlane.xlu0 %370
  %v372 = vsel %vm268, %v362, 0.0
  %373 = vadd.xlane.f32.xlu0 %v372
  %v374 = vpop.xlane.xlu0 %373
  %v375 = vrcp.pop %v365
  %v376 = vmul.f32 %v365, %v375
  %v377 = vsub.f32 1.0, %v376
  %v378 = vmul.f32 %v375, %v377
  %v379 = vadd.f32 %v375, %v378
  %vm380 = vweird.f32 %v365
  %vm381 = vweird.f32 %v375
  %vm382 = vmor %vm380, %vm381
  %v383 = vsel %vm382, %v375, %v379
  %v384 = vand.u32 2147483647, %v365
  %vm385 = vcmp.eq.f32.partialorder %v384, 8.507059e+37
  %v386 = vand.u32 %v365, 2147483648
  %v387 = vor.u32 1.1754944e-38, %v386
  %v388 = vsel %vm385, %v387, %v383
  %v389 = vmul.f32 %v356, %v388
  %v390 = vrcp.pop %v368
  %v391 = vmul.f32 %v368, %v390
  %v392 = vsub.f32 1.0, %v391
  %v393 = vmul.f32 %v390, %v392
  %v394 = vadd.f32 %v390, %v393
  %vm395 = vweird.f32 %v368
  %vm396 = vweird.f32 %v390
  %vm397 = vmor %vm395, %vm396
  %v398 = vsel %vm397, %v390, %v394
  %v399 = vand.u32 2147483647, %v368
  %vm400 = vcmp.eq.f32.partialorder %v399, 8.507059e+37
  %v401 = vand.u32 %v368, 2147483648
  %v402 = vor.u32 1.1754944e-38, %v401
  %v403 = vsel %vm400, %v402, %v398
  %v404 = vmul.f32 %v358, %v403
  %v405 = vrcp.pop %v371
  %v406 = vmul.f32 %v371, %v405
  %v407 = vsub.f32 1.0, %v406
  %v408 = vmul.f32 %v405, %v407
  %v409 = vadd.f32 %v405, %v408
  %vm410 = vweird.f32 %v371
  %vm411 = vweird.f32 %v405
  %vm412 = vmor %vm410, %vm411
  %v413 = vsel %vm412, %v405, %v409
  %v414 = vand.u32 2147483647, %v371
  %vm415 = vcmp.eq.f32.partialorder %v414, 8.507059e+37
  %v416 = vand.u32 %v371, 2147483648
  %v417 = vor.u32 1.1754944e-38, %v416
  %v418 = vsel %vm415, %v417, %v413
  %v419 = vmul.f32 %v360, %v418
  %v420 = vrcp.pop %v374
  %v421 = vmul.f32 %v374, %v420
  %v422 = vsub.f32 1.0, %v421
  %v423 = vmul.f32 %v420, %v422
  %v424 = vadd.f32 %v420, %v423
  %vm425 = vweird.f32 %v374
  %vm426 = vweird.f32 %v420
  %vm427 = vmor %vm425, %vm426
  %v428 = vsel %vm427, %v420, %v424
  %v429 = vand.u32 2147483647, %v374
  %vm430 = vcmp.eq.f32.partialorder %v429, 8.507059e+37
  %v431 = vand.u32 %v374, 2147483648
  %v432 = vor.u32 1.1754944e-38, %v431
  %v433 = vsel %vm430, %v432, %v428
  %v434 = vmul.f32 %v362, %v433
  %435 = vrot.lane.b32.xlu0 %v257, 64
  %v436 = vpop.permute.xlu0 %435
  %437 = vrot.lane.b32.xlu0 %v260, 64
  %v438 = vpop.permute.xlu0 %437
  %v442 = vsel %vm268, %v389, 0
  %v445 = vsel %vm268, %v404, 0
  %447 = vmatpush.msra.mxu0 0.0
  %448 = vmatpush.msra.mxu0 0.0
  %449 = vmatpush.msra.mxu0 0.0
  %450 = vmatpush.msra.mxu0 0.0
  %451 = vmatpush.msra.mxu0 0.0
  %452 = vmatpush.msra.mxu0 0.0
  %453 = vmatpush.msra.mxu0 0.0
  %454 = vmatpush.msra.mxu0 0.0
  %455 = vmatpush.msra.mxu0 0.0
  %456 = vmatpush.msra.mxu0 0.0
  %457 = vmatpush.msra.mxu0 0.0
  %458 = vmatpush.msra.mxu0 0.0
  %459 = vmatpush.msra.mxu0 0.0
  %460 = vmatpush.msra.mxu0 0.0
  %461 = vmatpush.msra.mxu0 %v438
  %462 = vmatpush.msra.mxu0 %v436
  %463 = vmatmul.f32.gmra.mxu0 %v442
  %v464 = vpop.f32.mrf.mxu0
  %v465 = vadd.f32 0.0, %v464
  %466 = vmatmul.f32.gmra.mxu0 %v445
  %v467 = vpop.f32.mrf.mxu0
  %v468 = vadd.f32 0.0, %v467
  %469 = vdwg.mxu0
  %470 = vrot.lane.b32.xlu0 %v257, 48
  %v471 = vpop.permute.xlu0 %470
  %472 = vrot.lane.b32.xlu0 %v260, 48
  %v473 = vpop.permute.xlu0 %472
  %v477 = vsel %vm268, %v419, 0
  %v480 = vsel %vm268, %v434, 0
  %482 = vmatpush.msra.mxu0 0.0
  %483 = vmatpush.msra.mxu0 0.0
  %484 = vmatpush.msra.mxu0 0.0
  %485 = vmatpush.msra.mxu0 0.0
  %486 = vmatpush.msra.mxu0 0.0
  %487 = vmatpush.msra.mxu0 0.0
  %488 = vmatpush.msra.mxu0 0.0
  %489 = vmatpush.msra.mxu0 0.0
  %490 = vmatpush.msra.mxu0 0.0
  %491 = vmatpush.msra.mxu0 0.0
  %492 = vmatpush.msra.mxu0 0.0
  %493 = vmatpush.msra.mxu0 0.0
  %494 = vmatpush.msra.mxu0 0.0
  %495 = vmatpush.msra.mxu0 0.0
  %496 = vmatpush.msra.mxu0 %v473
  %497 = vmatpush.msra.mxu0 %v471
  %498 = vmatmul.f32.gmra.mxu0 %v477
  %v499 = vpop.f32.mrf.mxu0
  %v500 = vadd.f32 0.0, %v499
  %501 = vmatmul.f32.gmra.mxu0 %v480
  %v502 = vpop.f32.mrf.mxu0
  %v503 = vadd.f32 0.0, %v502
  %504 = vdwg.mxu0
  %v506 = vsel %vm268, %v500, 0
  %v509 = vsel %vm268, %v503, 0
  %511 = vmatpush.msra.mxu0 0.0
  %512 = vmatpush.msra.mxu0 0.0
  %513 = vmatpush.msra.mxu0 0.0
  %514 = vmatpush.msra.mxu0 0.0
  %515 = vmatpush.msra.mxu0 0.0
  %516 = vmatpush.msra.mxu0 0.0
  %517 = vmatpush.msra.mxu0 0.0
  %518 = vmatpush.msra.mxu0 0.0
  %519 = vmatpush.msra.mxu0 0.0
  %520 = vmatpush.msra.mxu0 0.0
  %521 = vmatpush.msra.mxu0 0.0
  %522 = vmatpush.msra.mxu0 0.0
  %523 = vmatpush.msra.mxu0 0.0
  %524 = vmatpush.msra.mxu0 0.0
  %525 = vmatpush.msra.mxu0 %v228
  %526 = vmatpush.msra.mxu0 %v227
  %527 = vmatmul.f32.gmra.mxu0 %v506
  %v528 = vpop.f32.mrf.mxu0
  %v529 = vadd.f32 0.0, %v528
  %530 = vmatmul.f32.gmra.mxu0 %v509
  %v531 = vpop.f32.mrf.mxu0
  %v532 = vadd.f32 0.0, %v531
  %533 = vdwg.mxu0
  %v535 = vsel %vm268, %v465, 0
  %v538 = vsel %vm268, %v468, 0
  %540 = vmatpush.msra.mxu0 0.0
  %541 = vmatpush.msra.mxu0 0.0
  %542 = vmatpush.msra.mxu0 0.0
  %543 = vmatpush.msra.mxu0 0.0
  %544 = vmatpush.msra.mxu0 0.0
  %545 = vmatpush.msra.mxu0 0.0
  %546 = vmatpush.msra.mxu0 0.0
  %547 = vmatpush.msra.mxu0 0.0
  %548 = vmatpush.msra.mxu0 0.0
  %549 = vmatpush.msra.mxu0 0.0
  %550 = vmatpush.msra.mxu0 0.0
  %551 = vmatpush.msra.mxu0 0.0
  %552 = vmatpush.msra.mxu0 0.0
  %553 = vmatpush.msra.mxu0 0.0
  %554 = vmatpush.msra.mxu0 %v226
  %555 = vmatpush.msra.mxu0 %v225
  %556 = vmatmul.f32.gmra.mxu0 %v535
  %v557 = vpop.f32.mrf.mxu0
  %v558 = vadd.f32 %v529, %v557
  %559 = vmatmul.f32.gmra.mxu0 %v538
  %v560 = vpop.f32.mrf.mxu0
  %v561 = vadd.f32 %v532, %v560
  %562 = vdwg.mxu0
  %v564 = vperm.slane %v229, 0
  %v566 = vadd.f32 %v558, %v564
  %v567 = vadd.f32 %v561, %v564
  %v568 = vadd.f32 %v199, %v566
  %v569 = vadd.f32 %v200, %v567
  %v570 = vld [vmem:[%s10] sm:$0x1]
  %v571 = vld [vmem:[%s11] sm:$0x1]
  %v572 = vsel %vm139, %v568, 0.0
  %573 = vadd.xlane.f32.xlu0 %v572
  %v574 = vpop.xlane.xlu0 %573
  %v575 = vsel %vm139, %v569, 0.0
  %576 = vadd.xlane.f32.xlu0 %v575
  %v577 = vpop.xlane.xlu0 %576
  %v578 = vmul.f32 %v574, %v152
  %v579 = vmul.f32 %v577, %v152
  %v580 = vsub.f32 %v568, %v578
  %v581 = vsub.f32 %v569, %v579
  %v582 = vmul.f32 %v580, %v580
  %v583 = vmul.f32 %v581, %v581
  %v584 = vsel %vm139, %v582, 0.0
  %585 = vadd.xlane.f32.xlu0 %v584
  %v586 = vpop.xlane.xlu0 %585
  %v587 = vsel %vm139, %v583, 0.0
  %588 = vadd.xlane.f32.xlu0 %v587
  %v589 = vpop.xlane.xlu0 %588
  %v590 = vmul.f32 %v586, %v152
  %v591 = vmul.f32 %v589, %v152
  %v592 = vadd.f32 %v590, 1e-05
  %v593 = vadd.f32 %v591, 1e-05
  %v594 = vrsqrt.pop %v592
  %v595 = vmul.f32 %v594, %v592
  %v596 = vmul.f32 %v595, %v594
  %v597 = vmul.f32 0.5, %v596
  %v598 = vsub.f32 1.5, %v597
  %v599 = vmul.f32 %v594, %v598
  %vm600 = vweird.f32 %v592
  %vm601 = vweird.f32 %v594
  %vm602 = vmor %vm600, %vm601
  %v603 = vsel %vm602, %v594, %v599
  %v604 = vrsqrt.pop %v593
  %v605 = vmul.f32 %v604, %v593
  %v606 = vmul.f32 %v605, %v604
  %v607 = vmul.f32 0.5, %v606
  %v608 = vsub.f32 1.5, %v607
  %v609 = vmul.f32 %v604, %v608
  %vm610 = vweird.f32 %v593
  %vm611 = vweird.f32 %v604
  %vm612 = vmor %vm610, %vm611
  %v613 = vsel %vm612, %v604, %v609
  %v614 = vmul.f32 %v580, %v603
  %v615 = vmul.f32 %v581, %v613
  %v617 = vperm.slane %v570, 0
  %v619 = vmul.f32 %v614, %v617
  %v620 = vmul.f32 %v615, %v617
  %v622 = vperm.slane %v571, 0
  %v624 = vadd.f32 %v619, %v622
  %v625 = vadd.f32 %v620, %v622
  %v626 = vld [vmem:[%s12] sm:$0xff]
  %v627 = vld [vmem:[%s12 + $0x8] sm:$0xff]
  %v628 = vld [vmem:[%s12 + $0x10] sm:$0xff]
  %v629 = vld [vmem:[%s12 + $0x18] sm:$0xff]
  %v630 = vld [vmem:[%s13] sm:$0x1]
  %v632 = vperm.slane %v630, 0
  %v635 = vsel %vm139, %v624, 0
  %v638 = vsel %vm139, %v625, 0
  %640 = vmatpush.msra.mxu0 0.0
  %641 = vmatpush.msra.mxu0 0.0
  %642 = vmatpush.msra.mxu0 0.0
  %643 = vmatpush.msra.mxu0 0.0
  %644 = vmatpush.msra.mxu0 0.0
  %645 = vmatpush.msra.mxu0 0.0
  %646 = vmatpush.msra.mxu0 0.0
  %647 = vmatpush.msra.mxu0 0.0
  %648 = vmatpush.msra.mxu0 0.0
  %649 = vmatpush.msra.mxu0 0.0
  %650 = vmatpush.msra.mxu0 0.0
  %651 = vmatpush.msra.mxu0 0.0
  %652 = vmatpush.msra.mxu0 %v629
  %653 = vmatpush.msra.mxu0 %v628
  %654 = vmatpush.msra.mxu0 %v627
  %655 = vmatpush.msra.mxu0 %v626
  %656 = vmatmul.f32.gmra.mxu0 %v635
  %v657 = vpop.f32.mrf.mxu0
  %v658 = vadd.f32 %v632, %v657
  %659 = vmatmul.f32.gmra.mxu0 %v638
  %v660 = vpop.f32.mrf.mxu0
  %v661 = vadd.f32 %v632, %v660
  %662 = vdwg.mxu0
  %v663 = vmul.f32 %v658, %v658
  %v664 = vmul.f32 %v661, %v661
  %v665 = vmul.f32 %v658, %v663
  %v666 = vmul.f32 %v661, %v664
  %v667 = vmul.f32 %v665, 0.044715
  %v668 = vmul.f32 %v666, 0.044715
  %v669 = vadd.f32 %v658, %v667
  %v670 = vadd.f32 %v661, %v668
  %v671 = vmul.f32 %v669, 0.7978846
  %v672 = vmul.f32 %v670, 0.7978846
  %v673 = vtanh.pop %v671
  %v674 = vtanh.pop %v672
  %v675 = vadd.f32 %v673, 1.0
  %v676 = vadd.f32 %v674, 1.0
  %v677 = vmul.f32 %v675, 0.5
  %v678 = vmul.f32 %v676, 0.5
  %v679 = vmul.f32 %v658, %v677
  %v680 = vmul.f32 %v661, %v678
  %v681 = vld [vmem:[%s14] sm:$0xff]
  %v682 = vld [vmem:[%s14 + $0x8] sm:$0xff]
  %v683 = vld [vmem:[%s14 + $0x10] sm:$0xff]
  %v684 = vld [vmem:[%s14 + $0x18] sm:$0xff]
  %v685 = vld [vmem:[%s14 + $0x20] sm:$0xff]
  %v686 = vld [vmem:[%s14 + $0x28] sm:$0xff]
  %v687 = vld [vmem:[%s14 + $0x30] sm:$0xff]
  %v688 = vld [vmem:[%s14 + $0x38] sm:$0xff]
  %v689 = vld [vmem:[%s14 + $0x40] sm:$0xff]
  %v690 = vld [vmem:[%s14 + $0x48] sm:$0xff]
  %v691 = vld [vmem:[%s14 + $0x50] sm:$0xff]
  %v692 = vld [vmem:[%s14 + $0x58] sm:$0xff]
  %v693 = vld [vmem:[%s14 + $0x60] sm:$0xff]
  %v694 = vld [vmem:[%s14 + $0x68] sm:$0xff]
  %v695 = vld [vmem:[%s14 + $0x70] sm:$0xff]
  %v696 = vld [vmem:[%s14 + $0x78] sm:$0xff]
  %v697 = vld [vmem:[%s15] sm:$0x1]
  %v699 = vperm.slane %v697, 0
  %701 = vmatpush.msra.mxu0 %v696
  %702 = vmatpush.msra.mxu0 %v695
  %703 = vmatpush.msra.mxu0 %v694
  %704 = vmatpush.msra.mxu0 %v693
  %705 = vmatpush.msra.mxu0 %v692
  %706 = vmatpush.msra.mxu0 %v691
  %707 = vmatpush.msra.mxu0 %v690
  %708 = vmatpush.msra.mxu0 %v689
  %709 = vmatpush.msra.mxu0 %v688
  %710 = vmatpush.msra.mxu0 %v687
  %711 = vmatpush.msra.mxu0 %v686
  %712 = vmatpush.msra.mxu0 %v685
  %713 = vmatpush.msra.mxu0 %v684
  %714 = vmatpush.msra.mxu0 %v683
  %715 = vmatpush.msra.mxu0 %v682
  %716 = vmatpush.msra.mxu0 %v681
  %717 = vmatmul.f32.gmra.mxu0 %v679
  %v718 = vpop.f32.mrf.mxu0
  %v719 = vadd.f32 %v699, %v718
  %720 = vmatmul.f32.gmra.mxu0 %v680
  %v721 = vpop.f32.mrf.mxu0
  %v722 = vadd.f32 %v699, %v721
  %723 = vdwg.mxu0
  %v724 = vadd.f32 %v624, %v719
  %v725 = vadd.f32 %v625, %v722
  %v726 = vld [vmem:[%s16] sm:$0x1]
  %v727 = vld [vmem:[%s17] sm:$0x1]
  %v728 = vsel %vm139, %v724, 0.0
  %729 = vadd.xlane.f32.xlu0 %v728
  %v730 = vpop.xlane.xlu0 %729
  %v731 = vsel %vm139, %v725, 0.0
  %732 = vadd.xlane.f32.xlu0 %v731
  %v733 = vpop.xlane.xlu0 %732
  %v734 = vmul.f32 %v730, %v152
  %v735 = vmul.f32 %v733, %v152
  %v736 = vsub.f32 %v724, %v734
  %v737 = vsub.f32 %v725, %v735
  %v738 = vmul.f32 %v736, %v736
  %v739 = vmul.f32 %v737, %v737
  %v740 = vsel %vm139, %v738, 0.0
  %741 = vadd.xlane.f32.xlu0 %v740
  %v742 = vpop.xlane.xlu0 %741
  %v743 = vsel %vm139, %v739, 0.0
  %744 = vadd.xlane.f32.xlu0 %v743
  %v745 = vpop.xlane.xlu0 %744
  %v746 = vmul.f32 %v742, %v152
  %v747 = vmul.f32 %v745, %v152
  %v748 = vadd.f32 %v746, 1e-05
  %v749 = vadd.f32 %v747, 1e-05
  %v750 = vrsqrt.pop %v748
  %v751 = vmul.f32 %v750, %v748
  %v752 = vmul.f32 %v751, %v750
  %v753 = vmul.f32 0.5, %v752
  %v754 = vsub.f32 1.5, %v753
  %v755 = vmul.f32 %v750, %v754
  %vm756 = vweird.f32 %v748
  %vm757 = vweird.f32 %v750
  %vm758 = vmor %vm756, %vm757
  %v759 = vsel %vm758, %v750, %v755
  %v760 = vrsqrt.pop %v749
  %v761 = vmul.f32 %v760, %v749
  %v762 = vmul.f32 %v761, %v760
  %v763 = vmul.f32 0.5, %v762
  %v764 = vsub.f32 1.5, %v763
  %v765 = vmul.f32 %v760, %v764
  %vm766 = vweird.f32 %v749
  %vm767 = vweird.f32 %v760
  %vm768 = vmor %vm766, %vm767
  %v769 = vsel %vm768, %v760, %v765
  %v770 = vmul.f32 %v736, %v759
  %v771 = vmul.f32 %v737, %v769
  %v773 = vperm.slane %v726, 0
  %v775 = vmul.f32 %v770, %v773
  %v776 = vmul.f32 %v771, %v773
  %v778 = vperm.slane %v727, 0
  %v780 = vadd.f32 %v775, %v778
  %v781 = vadd.f32 %v776, %v778
  %v782 = vld [vmem:[%s18] sm:$0xff]
  %v783 = vld [vmem:[%s18 + $0x8] sm:$0xff]
  %v784 = vld [vmem:[%s18 + $0x10] sm:$0xff]
  %v785 = vld [vmem:[%s18 + $0x18] sm:$0xff]
  %v786 = vld [vmem:[%s19] sm:$0x1]
  %v787 = vld [vmem:[%s20] sm:$0xff]
  %v788 = vld [vmem:[%s20 + $0x8] sm:$0xff]
  %v789 = vld [vmem:[%s20 + $0x10] sm:$0xff]
  %v790 = vld [vmem:[%s20 + $0x18] sm:$0xff]
  %v791 = vld [vmem:[%s21] sm:$0x1]
  %v793 = vperm.slane %v786, 0
  %v796 = vsel %vm139, %v780, 0
  %v799 = vsel %vm139, %v781, 0
  %801 = vmatpush.msra.mxu0 0.0
  %802 = vmatpush.msra.mxu0 0.0
  %803 = vmatpush.msra.mxu0 0.0
  %804 = vmatpush.msra.mxu0 0.0
  %805 = vmatpush.msra.mxu0 0.0
  %806 = vmatpush.msra.mxu0 0.0
  %807 = vmatpush.msra.mxu0 0.0
  %808 = vmatpush.msra.mxu0 0.0
  %809 = vmatpush.msra.mxu0 0.0
  %810 = vmatpush.msra.mxu0 0.0
  %811 = vmatpush.msra.mxu0 0.0
  %812 = vmatpush.msra.mxu0 0.0
  %813 = vmatpush.msra.mxu0 %v785
  %814 = vmatpush.msra.mxu0 %v784
  %815 = vmatpush.msra.mxu0 %v783
  %816 = vmatpush.msra.mxu0 %v782
  %817 = vmatmul.f32.gmra.mxu0 %v796
  %v818 = vpop.f32.mrf.mxu0
  %v819 = vadd.f32 %v793, %v818
  %820 = vmatmul.f32.gmra.mxu0 %v799
  %v821 = vpop.f32.mrf.mxu0
  %v822 = vadd.f32 %v793, %v821
  %823 = vdwg.mxu0
  %826 = vrot.lane.b32.xlu0 %v819, 96
  %v827 = vpop.permute.xlu0 %826
  %828 = vrot.lane.b32.xlu0 %v822, 96
  %v829 = vpop.permute.xlu0 %828
  %v830 = vsel %vm139, %v819, 0
  %v832 = vsel %vm139, %v822, 0
  %v834 = vsel %vm139, %v827, 0
  %v836 = vsel %vm139, %v829, 0
  %838 = vmatpush.xpose.msra.mxu0 0.0
  %839 = vmatpush.xpose.msra.mxu0 0.0
  %840 = vmatpush.xpose.msra.mxu0 0.0
  %841 = vmatpush.xpose.msra.mxu0 0.0
  %842 = vmatpush.xpose.msra.mxu0 0.0
  %843 = vmatpush.xpose.msra.mxu0 0.0
  %844 = vmatpush.xpose.msra.mxu0 0.0
  %845 = vmatpush.xpose.msra.mxu0 0.0
  %846 = vmatpush.xpose.msra.mxu0 0.0
  %847 = vmatpush.xpose.msra.mxu0 0.0
  %848 = vmatpush.xpose.msra.mxu0 0.0
  %849 = vmatpush.xpose.msra.mxu0 0.0
  %850 = vmatpush.xpose.msra.mxu0 0.0
  %851 = vmatpush.xpose.msra.mxu0 0.0
  %852 = vmatpush.xpose.msra.mxu0 %v836
  %853 = vmatpush.xpose.msra.mxu0 %v834
  %854 = vmatmul.f32.gmra.mxu0 %v830
  %v855 = vpop.f32.mrf.mxu0
  %v856 = vadd.f32 %v218, %v855
  %857 = vmatmul.f32.gmra.mxu0 %v832
  %v858 = vpop.f32.mrf.mxu0
  %v859 = vadd.f32 %v219, %v858
  %860 = vdwg.mxu0
  %v861 = vsel %vm268, %v856, -inf
  %862 = vmax.xlane.f32.xlu0 %v861
  %v863 = vpop.xlane.xlu0 %862
  %v864 = vsel %vm268, %v859, -inf
  %865 = vmax.xlane.f32.xlu0 %v864
  %v866 = vpop.xlane.xlu0 %865
  %v867 = vsub.f32 %v856, %v863
  %v868 = vsub.f32 %v859, %v866
  %v869 = vmul.f32 %v867, 1.442695
  %v870 = vpow.pop %v869
  %v871 = vmul.f32 %v868, 1.442695
  %v872 = vpow.pop %v871
  %v873 = vsel %vm268, %v870, 0.0
  %874 = vadd.xlane.f32.xlu0 %v873
  %v875 = vpop.xlane.xlu0 %874
  %v876 = vsel %vm268, %v872, 0.0
  %877 = vadd.xlane.f32.xlu0 %v876
  %v878 = vpop.xlane.xlu0 %877
  %v879 = vrcp.pop %v875
  %v880 = vmul.f32 %v875, %v879
  %v881 = vsub.f32 1.0, %v880
  %v882 = vmul.f32 %v879, %v881
  %v883 = vadd.f32 %v879, %v882
  %vm884 = vweird.f32 %v875
  %vm885 = vweird.f32 %v879
  %vm886 = vmor %vm884, %vm885
  %v887 = vsel %vm886, %v879, %v883
  %v888 = vand.u32 2147483647, %v875
  %vm889 = vcmp.eq.f32.partialorder %v888, 8.507059e+37
  %v890 = vand.u32 %v875, 2147483648
  %v891 = vor.u32 1.1754944e-38, %v890
  %v892 = vsel %vm889, %v891, %v887
  %v893 = vmul.f32 %v870, %v892
  %v894 = vrcp.pop %v878
  %v895 = vmul.f32 %v878, %v894
  %v896 = vsub.f32 1.0, %v895
  %v897 = vmul.f32 %v894, %v896
  %v898 = vadd.f32 %v894, %v897
  %vm899 = vweird.f32 %v878
  %vm900 = vweird.f32 %v894
  %vm901 = vmor %vm899, %vm900
  %v902 = vsel %vm901, %v894, %v898
  %v903 = vand.u32 2147483647, %v878
  %vm904 = vcmp.eq.f32.partialorder %v903, 8.507059e+37
  %v905 = vand.u32 %v878, 2147483648
  %v906 = vor.u32 1.1754944e-38, %v905
  %v907 = vsel %vm904, %v906, %v902
  %v908 = vmul.f32 %v872, %v907
  %909 = vrot.lane.b32.xlu0 %v819, 64
  %v910 = vpop.permute.xlu0 %909
  %911 = vrot.lane.b32.xlu0 %v822, 64
  %v912 = vpop.permute.xlu0 %911
  %v916 = vsel %vm268, %v893, 0
  %v919 = vsel %vm268, %v908, 0
  %921 = vmatpush.msra.mxu0 0.0
  %922 = vmatpush.msra.mxu0 0.0
  %923 = vmatpush.msra.mxu0 0.0
  %924 = vmatpush.msra.mxu0 0.0
  %925 = vmatpush.msra.mxu0 0.0
  %926 = vmatpush.msra.mxu0 0.0
  %927 = vmatpush.msra.mxu0 0.0
  %928 = vmatpush.msra.mxu0 0.0
  %929 = vmatpush.msra.mxu0 0.0
  %930 = vmatpush.msra.mxu0 0.0
  %931 = vmatpush.msra.mxu0 0.0
  %932 = vmatpush.msra.mxu0 0.0
  %933 = vmatpush.msra.mxu0 0.0
  %934 = vmatpush.msra.mxu0 0.0
  %935 = vmatpush.msra.mxu0 %v912
  %936 = vmatpush.msra.mxu0 %v910
  %937 = vmatmul.f32.gmra.mxu0 %v916
  %v938 = vpop.f32.mrf.mxu0
  %v939 = vadd.f32 0.0, %v938
  %940 = vmatmul.f32.gmra.mxu0 %v919
  %v941 = vpop.f32.mrf.mxu0
  %v942 = vadd.f32 0.0, %v941
  %943 = vdwg.mxu0
  %v945 = vperm.slane %v791, 0
  %v948 = vsel %vm139, %v939, 0
  %v951 = vsel %vm139, %v942, 0
  %953 = vmatpush.msra.mxu0 0.0
  %954 = vmatpush.msra.mxu0 0.0
  %955 = vmatpush.msra.mxu0 0.0
  %956 = vmatpush.msra.mxu0 0.0
  %957 = vmatpush.msra.mxu0 0.0
  %958 = vmatpush.msra.mxu0 0.0
  %959 = vmatpush.msra.mxu0 0.0
  %960 = vmatpush.msra.mxu0 0.0
  %961 = vmatpush.msra.mxu0 0.0
  %962 = vmatpush.msra.mxu0 0.0
  %963 = vmatpush.msra.mxu0 0.0
  %964 = vmatpush.msra.mxu0 0.0
  %965 = vmatpush.msra.mxu0 %v790
  %966 = vmatpush.msra.mxu0 %v789
  %967 = vmatpush.msra.mxu0 %v788
  %968 = vmatpush.msra.mxu0 %v787
  %969 = vmatmul.f32.gmra.mxu0 %v948
  %v970 = vpop.f32.mrf.mxu0
  %v971 = vadd.f32 %v945, %v970
  %972 = vmatmul.f32.gmra.mxu0 %v951
  %v973 = vpop.f32.mrf.mxu0
  %v974 = vadd.f32 %v945, %v973
  %975 = vdwg.mxu0
  %v976 = vadd.f32 %v780, %v971
  %v977 = vadd.f32 %v781, %v974
  %v978 = vld [vmem:[%s22] sm:$0x1]
  %v979 = vld [vmem:[%s23] sm:$0x1]
  %v980 = vsel %vm139, %v976, 0.0
  %981 = vadd.xlane.f32.xlu0 %v980
  %v982 = vpop.xlane.xlu0 %981
  %v983 = vsel %vm139, %v977, 0.0
  %984 = vadd.xlane.f32.xlu0 %v983
  %v985 = vpop.xlane.xlu0 %984
  %v986 = vmul.f32 %v982, %v152
  %v987 = vmul.f32 %v985, %v152
  %v988 = vsub.f32 %v976, %v986
  %v989 = vsub.f32 %v977, %v987
  %v990 = vmul.f32 %v988, %v988
  %v991 = vmul.f32 %v989, %v989
  %v992 = vsel %vm139, %v990, 0.0
  %993 = vadd.xlane.f32.xlu0 %v992
  %v994 = vpop.xlane.xlu0 %993
  %v995 = vsel %vm139, %v991, 0.0
  %996 = vadd.xlane.f32.xlu0 %v995
  %v997 = vpop.xlane.xlu0 %996
  %v998 = vmul.f32 %v994, %v152
  %v999 = vmul.f32 %v997, %v152
  %v1000 = vadd.f32 %v998, 1e-05
  %v1001 = vadd.f32 %v999, 1e-05
  %v1002 = vrsqrt.pop %v1000
  %v1003 = vmul.f32 %v1002, %v1000
  %v1004 = vmul.f32 %v1003, %v1002
  %v1005 = vmul.f32 0.5, %v1004
  %v1006 = vsub.f32 1.5, %v1005
  %v1007 = vmul.f32 %v1002, %v1006
  %vm1008 = vweird.f32 %v1000
  %vm1009 = vweird.f32 %v1002
  %vm1010 = vmor %vm1008, %vm1009
  %v1011 = vsel %vm1010, %v1002, %v1007
  %v1012 = vrsqrt.pop %v1001
  %v1013 = vmul.f32 %v1012, %v1001
  %v1014 = vmul.f32 %v1013, %v1012
  %v1015 = vmul.f32 0.5, %v1014
  %v1016 = vsub.f32 1.5, %v1015
  %v1017 = vmul.f32 %v1012, %v1016
  %vm1018 = vweird.f32 %v1001
  %vm1019 = vweird.f32 %v1012
  %vm1020 = vmor %vm1018, %vm1019
  %v1021 = vsel %vm1020, %v1012, %v1017
  %v1022 = vmul.f32 %v988, %v1011
  %v1023 = vmul.f32 %v989, %v1021
  %v1025 = vperm.slane %v978, 0
  %v1027 = vmul.f32 %v1022, %v1025
  %v1028 = vmul.f32 %v1023, %v1025
  %v1030 = vperm.slane %v979, 0
  %v1032 = vadd.f32 %v1027, %v1030
  %v1033 = vadd.f32 %v1028, %v1030
  %v1034 = vld [vmem:[%s24] sm:$0xff]
  %v1035 = vld [vmem:[%s24 + $0x8] sm:$0xff]
  %v1036 = vld [vmem:[%s24 + $0x10] sm:$0xff]
  %v1037 = vld [vmem:[%s24 + $0x18] sm:$0xff]
  %v1039 = vsel %vm139, %v1032, 0
  %v1042 = vsel %vm139, %v1033, 0
  %1044 = vmatpush.msra.mxu0 0.0
  %1045 = vmatpush.msra.mxu0 0.0
  %1046 = vmatpush.msra.mxu0 0.0
  %1047 = vmatpush.msra.mxu0 0.0
  %1048 = vmatpush.msra.mxu0 0.0
  %1049 = vmatpush.msra.mxu0 0.0
  %1050 = vmatpush.msra.mxu0 0.0
  %1051 = vmatpush.msra.mxu0 0.0
  %1052 = vmatpush.msra.mxu0 0.0
  %1053 = vmatpush.msra.mxu0 0.0
  %1054 = vmatpush.msra.mxu0 0.0
  %1055 = vmatpush.msra.mxu0 0.0
  %1056 = vmatpush.msra.mxu0 %v1037
  %1057 = vmatpush.msra.mxu0 %v1036
  %1058 = vmatpush.msra.mxu0 %v1035
  %1059 = vmatpush.msra.mxu0 %v1034
  %1060 = vmatmul.f32.gmra.mxu0 %v1039
  %v1061 = vpop.f32.mrf.mxu0
  %v1062 = vadd.f32 0.0, %v1061
  %1063 = vmatmul.f32.gmra.mxu0 %v1042
  %v1064 = vpop.f32.mrf.mxu0
  %v1065 = vadd.f32 0.0, %v1064
  %1066 = vdwg.mxu0
  %1067 = vst [vmem:[%s25] sm:$0xff] %v1062
  %1068 = vst [vmem:[%s25 + $0x8] sm:$0xff] %v1065
  // Predicated region
  $region102: #{forward.1} parent=0 // pred_check
    _
  $region103: #{forward.1} parent=0 // pred_check_branch
    %1070 = sbr.rel (0) target = $region105
  $region104: #{forward.1} parent=0 // pred_region
    _
  $region105: #{forward.1} parent=0 // pred_fallthru
    _
  // Predicated region
  $region106: #{forward.1} parent=0 // pred_check
    _
  $region107: #{forward.1} parent=0 // pred_check_branch
    %1072 = sbr.rel (0) target = $region109
  $region108: #{forward.1} parent=0 // pred_region
    _
  $region109: #{forward.1} parent=0 // pred_fallthru
    _

</llo_original>
